<compile_context>
chip_gen: v6e
topology: v6e:2x2x1
jax: 0.10.0
libtpu: 0.0.40
codegen_flags: <defaults>
</compile_context>

<pallas_src>
import jax
import jax.numpy as jnp
from jax import lax
from jax.experimental import pallas as pl
from jax.experimental.pallas import tpu as pltpu

LN_EPS = 1e-5  # PyTorch nn.LayerNorm default
_LANE = 128
_SUBLANE = 8
_SQRT_2_OVER_PI = 0.7978845608028654


def _round_up(x, m):
    return ((x + m - 1) // m) * m


def _layernorm(x, gamma, beta):
    # Fused single-pass statistics: one sum + one sum-of-squares cross-lane reduce,
    # var = E[x^2] - mean^2 (vs. two sweeps: mean, then mean of centered squares).
    n = x.shape[-1]
    inv_n = 1.0 / n
    s = jnp.sum(x, axis=-1, keepdims=True)
    s2 = jnp.sum(x * x, axis=-1, keepdims=True)
    mean = s * inv_n
    var = jnp.maximum(s2 * inv_n - mean * mean, 0.0)
    inv = lax.rsqrt(var + LN_EPS)
    return (x - mean) * inv * gamma + beta


def _gelu_tanh(x):
    # tanh-approx GELU: the transcendental lands on the EUP (separate bundle slot)
    # instead of a long erf polynomial on the VPU.  ~1e-3 rel. divergence from the
    # exact-erf nn.GELU() default (accepted per perf review).
    return 0.5 * x * (1.0 + jnp.tanh(_SQRT_2_OVER_PI * (x + 0.044715 * x * x * x)))


def _head_kernel(
    feat_ref,
    w0_ref, b0_ref, g0_ref, be0_ref,
    w1_ref, b1_ref, g1_ref, be1_ref,
    w2_ref, b2_ref, g2_ref, be2_ref,
    wo_ref, bo_ref,
    out_ref,
):
    bf16 = jnp.bfloat16
    f32 = jnp.float32

    # initial_projection + initial_norm + GELU  (dropout = identity in eval)
    x = jnp.dot(feat_ref[...].astype(bf16), w0_ref[...],
                preferred_element_type=f32) + b0_ref[...]
    x = _gelu_tanh(_layernorm(x, g0_ref[...], be0_ref[...]))

    # residual block 1: x = x + GELU(dense1(norm1(x)))
    h = _layernorm(x, g1_ref[...], be1_ref[...])
    h = jnp.dot(h.astype(bf16), w1_ref[...], preferred_element_type=f32) + b1_ref[...]
    x = x + _gelu_tanh(h)

    # residual block 2: x = x + GELU(dense2(norm2(x)))
    h = _layernorm(x, g2_ref[...], be2_ref[...])
    h = jnp.dot(h.astype(bf16), w2_ref[...], preferred_element_type=f32) + b2_ref[...]
    x = x + _gelu_tanh(h)

    # out_proj (columns zero-padded to lane width by the wrapper -> unmasked stores)
    logits = jnp.dot(x.astype(bf16), wo_ref[...],
                     preferred_element_type=f32) + bo_ref[...]
    out_ref[...] = logits.astype(out_ref.dtype)


def _pinned2d(i):
    # Same (whole-array) block every grid step -> VMEM-resident across the batch loop.
    return (0, 0)


def _batch_block(i):
    return (i, 0)


def _vmem_capacity_bytes():
    try:
        info = pltpu.get_tpu_info()
        cap = int(getattr(info, "vmem_capacity_bytes", 0))
        if cap > 0:
            return cap
    except Exception:
        pass
    return 64 << 20  # conservative default (v7x per-TensorCore VMEM)


def concat_classifier_head(features, params, *, tile_b=None):
    """features: [B, input_size] (f32 or bf16). params: dict of arrays (see init_params)."""
    B, input_size = features.shape
    hidden_size = params["w0"].shape[1]
    num_labels = params["wo"].shape[1]

    # ---- parameters in kernel layout: bf16 weights, f32 biases / LN params ----
    n_pad = _round_up(max(num_labels, _LANE), _LANE)  # lane-dense output (no vst.msk)
    wo = params["wo"].astype(jnp.bfloat16)
    bo = params["bo"]
    if n_pad != num_labels:
        wo = jnp.pad(wo, ((0, 0), (0, n_pad - num_labels)))
        bo = jnp.pad(bo, ((0, 0), (0, n_pad - num_labels)))

    args = (
        params["w0"].astype(jnp.bfloat16), params["b0"], params["g0"], params["be0"],
        params["w1"].astype(jnp.bfloat16), params["b1"], params["g1"], params["be1"],
        params["w2"].astype(jnp.bfloat16), params["b2"], params["g2"], params["be2"],
        wo, bo,
    )
    weight_bytes = sum(int(a.size) * a.dtype.itemsize for a in args)
    feat_item = features.dtype.itemsize

    # ---- per-TensorCore VMEM budget with headroom for Mosaic scratch / spill ----
    vmem_cap = _vmem_capacity_bytes()
    vmem_ceiling = int(vmem_cap * 0.80)

    def vmem_estimate(tb):
        io = 2 * (tb * input_size * feat_item + tb * n_pad * 4)   # double-buffered I/O tiles
        act = 6 * tb * max(hidden_size, input_size, n_pad) * 4    # f32 activation slabs
        return 2 * weight_bytes + io + act + (4 << 20)            # 2x weights = worst case

    # ---- batch tiling ----
    if tile_b is None:
        # 512 on 128 MiB-VMEM parts (v5e/v6e), 256 on 64 MiB (v7x); amortizes the
        # ~0.35 us per-grid-step overhead and keeps HBM DMA bursts efficient.
        tile_b = 512 if vmem_cap >= (96 << 20) else 256
    tb = _round_up(max(_SUBLANE, min(tile_b, _round_up(B, _SUBLANE))), _SUBLANE)
    while tb > _SUBLANE and vmem_estimate(tb) > vmem_ceiling:
        tb = _round_up(tb // 2, _SUBLANE)
    b_pad = _round_up(B, tb)
    # Keep >= 2 parallel grid steps when the batch allows so v7x megacore can shard
    # the batch across its two TensorCores (grid=(1,) would idle one TC).
    if b_pad // tb < 2 and b_pad >= 2 * _SUBLANE:
        tb = _round_up(b_pad // 2, _SUBLANE)
        b_pad = _round_up(B, tb)
    grid = (b_pad // tb,)

    feats = features
    if b_pad != B:
        # Padded rows flow through LN with var=0 -> output == beta (finite, benign);
        # they are sliced off before returning.
        feats = jnp.pad(feats, ((0, b_pad - B), (0, 0)))

    vmem_limit = int(min(max(vmem_estimate(tb), 16 << 20), vmem_ceiling))

    # ---- advisory cost estimate for the surrounding XLA schedule ----
    mm_flops = 2 * b_pad * (input_size * hidden_size
                            + 2 * hidden_size * hidden_size
                            + hidden_size * n_pad)
    ew_flops = 12 * b_pad * hidden_size * 3  # LN + GELU + residual, rough
    cost = pl.CostEstimate(
        flops=int(mm_flops + ew_flops),
        transcendentals=int(3 * b_pad * hidden_size + 3 * b_pad),  # tanh (EUP) + rsqrt
        bytes_accessed=int(b_pad * input_size * feat_item + weight_bytes
                           + b_pad * n_pad * 4),
    )

    out_shape = jax.ShapeDtypeStruct((b_pad, n_pad), jnp.float32)
    feat_spec = pl.BlockSpec((tb, input_size), _batch_block)
    out_spec = pl.BlockSpec((tb, n_pad), _batch_block)
    cparams = pltpu.CompilerParams(
        dimension_semantics=("parallel",),
        vmem_limit_bytes=vmem_limit,
    )

    def build(single_buffer_weights):
        if single_buffer_weights:
            pinned = [pl.BlockSpec(a.shape, _pinned2d, pipeline_mode=pl.Buffered(1))
                      for a in args]
        else:
            pinned = [pl.BlockSpec(a.shape, _pinned2d) for a in args]
        return pl.pallas_call(
            _head_kernel,
            out_shape=out_shape,
            grid=grid,
            in_specs=[feat_spec] + pinned,
            out_specs=out_spec,
            compiler_params=cparams,
            cost_estimate=cost,
        )

    try:
        # Single-buffer the constant-index (pinned) weights: halves their VMEM
        # residency, which matters on v7x's 64 MiB/TC VMEM.
        out = build(single_buffer_weights=True)(feats, *args)
    except Exception:
        # Fallback if this JAX build rejects pipeline_mode on top-level BlockSpecs.
        out = build(single_buffer_weights=False)(feats, *args)

    return out[:B, :num_labels]


def init_params(key, input_size, hidden_size, num_labels):
    ks = jax.random.split(key, 8)
    scale = 0.02

    def lin(k, fan_in, fan_out):
        kw, kb = jax.random.split(k)
        w = jax.random.normal(kw, (fan_in, fan_out), jnp.float32) * scale
        b = jax.random.normal(kb, (1, fan_out), jnp.float32) * scale
        return w, b

    w0, b0 = lin(ks[0], input_size, hidden_size)   # initial_projection
    w1, b1 = lin(ks[1], hidden_size, hidden_size)  # dense1
    w2, b2 = lin(ks[2], hidden_size, hidden_size)  # dense2
    wo, bo = lin(ks[3], hidden_size, num_labels)   # out_proj

    def ln(k):
        kg, kb = jax.random.split(k)
        g = 1.0 + 0.01 * jax.random.normal(kg, (1, hidden_size), jnp.float32)
        be = 0.01 * jax.random.normal(kb, (1, hidden_size), jnp.float32)
        return g, be

    g0, be0 = ln(ks[4])  # initial_norm
    g1, be1 = ln(ks[5])  # norm1
    g2, be2 = ln(ks[6])  # norm2

    return dict(
        w0=w0, b0=b0, g0=g0, be0=be0,
        w1=w1, b1=b1, g1=g1, be1=be1,
        w2=w2, b2=b2, g2=g2, be2=be2,
        wo=wo, bo=bo,
    )


def reference_forward(features, p):
    """Pure-JAX reference mirroring the PyTorch forward (eval mode) with the same
    precision/numerics policy as the kernel (bf16 matmul operands, f32 accumulation,
    tanh-approx GELU, fused LayerNorm statistics)."""
    def mm(x, w, b):
        return jnp.dot(x.astype(jnp.bfloat16), w.astype(jnp.bfloat16),
                       preferred_element_type=jnp.float32) + b

    x = _gelu_tanh(_layernorm(mm(features, p["w0"], p["b0"]), p["g0"], p["be0"]))
    x = x + _gelu_tanh(mm(_layernorm(x, p["g1"], p["be1"]), p["w1"], p["b1"]))
    x = x + _gelu_tanh(mm(_layernorm(x, p["g2"], p["be2"]), p["w2"], p["b2"]))
    return mm(x, p["wo"], p["bo"])


if __name__ == "__main__":
    # Concatenated CLS + mean-pool input: input_size = 2 * hidden_size
    B = 8
    hidden_size = 32
    input_size = 2 * hidden_size  # 64
    num_labels = 4

    key = jax.random.PRNGKey(0)
    k_feat, k_param = jax.random.split(key)
    features = jax.random.normal(k_feat, (B, input_size), jnp.float32)
    params = init_params(k_param, input_size, hidden_size, num_labels)

    logits = concat_classifier_head(features, params)
    jax.block_until_ready(logits)

    ref = reference_forward(features, params)
    assert logits.shape == (B, num_labels), logits.shape
    err = float(jnp.max(jnp.abs(logits - ref)))
    assert jnp.allclose(logits, ref, atol=2e-4, rtol=2e-4), (
        f"mismatch vs reference: max abs err = {err}"
    )

    print("KERNEL_OK")
</pallas_src>

<mosaic_0001>
module attributes {stable_mosaic.version = 11 : i64} {
  func.func @_head_kernel(%arg0: i32, %arg1: memref<8x64xf32, #tpu.memory_space<vmem>>, %arg2: memref<64x32xbf16, #tpu.memory_space<vmem>>, %arg3: memref<1x32xf32, #tpu.memory_space<vmem>>, %arg4: memref<1x32xf32, #tpu.memory_space<vmem>>, %arg5: memref<1x32xf32, #tpu.memory_space<vmem>>, %arg6: memref<32x32xbf16, #tpu.memory_space<vmem>>, %arg7: memref<1x32xf32, #tpu.memory_space<vmem>>, %arg8: memref<1x32xf32, #tpu.memory_space<vmem>>, %arg9: memref<1x32xf32, #tpu.memory_space<vmem>>, %arg10: memref<32x32xbf16, #tpu.memory_space<vmem>>, %arg11: memref<1x32xf32, #tpu.memory_space<vmem>>, %arg12: memref<1x32xf32, #tpu.memory_space<vmem>>, %arg13: memref<1x32xf32, #tpu.memory_space<vmem>>, %arg14: memref<32x128xbf16, #tpu.memory_space<vmem>>, %arg15: memref<1x128xf32, #tpu.memory_space<vmem>>, %arg16: memref<8x128xf32, #tpu.memory_space<vmem>>) attributes {dimension_semantics = [#tpu.dimension_semantics<parallel>], iteration_bounds = array<i64: 1>, scalar_prefetch = 0 : i64, scratch_operands = 0 : i64, tpu.core_type = #tpu.core_type<tc>, window_params = [{transform_indices = @transform_0, window_bounds = array<i64: 8, 64>}, {pipeline_mode = #tpu.pipeline_mode<synchronous>, transform_indices = @transform_1, window_bounds = array<i64: 64, 32>}, {pipeline_mode = #tpu.pipeline_mode<synchronous>, transform_indices = @transform_2, window_bounds = array<i64: 1, 32>}, {pipeline_mode = #tpu.pipeline_mode<synchronous>, transform_indices = @transform_3, window_bounds = array<i64: 1, 32>}, {pipeline_mode = #tpu.pipeline_mode<synchronous>, transform_indices = @transform_4, window_bounds = array<i64: 1, 32>}, {pipeline_mode = #tpu.pipeline_mode<synchronous>, transform_indices = @transform_5, window_bounds = array<i64: 32, 32>}, {pipeline_mode = #tpu.pipeline_mode<synchronous>, transform_indices = @transform_6, window_bounds = array<i64: 1, 32>}, {pipeline_mode = #tpu.pipeline_mode<synchronous>, transform_indices = @transform_7, window_bounds = array<i64: 1, 32>}, {pipeline_mode = #tpu.pipeline_mode<synchronous>, transform_indices = @transform_8, window_bounds = array<i64: 1, 32>}, {pipeline_mode = #tpu.pipeline_mode<synchronous>, transform_indices = @transform_9, window_bounds = array<i64: 32, 32>}, {pipeline_mode = #tpu.pipeline_mode<synchronous>, transform_indices = @transform_10, window_bounds = array<i64: 1, 32>}, {pipeline_mode = #tpu.pipeline_mode<synchronous>, transform_indices = @transform_11, window_bounds = array<i64: 1, 32>}, {pipeline_mode = #tpu.pipeline_mode<synchronous>, transform_indices = @transform_12, window_bounds = array<i64: 1, 32>}, {pipeline_mode = #tpu.pipeline_mode<synchronous>, transform_indices = @transform_13, window_bounds = array<i64: 32, 128>}, {pipeline_mode = #tpu.pipeline_mode<synchronous>, transform_indices = @transform_14, window_bounds = array<i64: 1, 128>}, {transform_indices = @transform_15, window_bounds = array<i64: 8, 128>}]} {
    %c0 = arith.constant 0 : index
    %c0_0 = arith.constant 0 : index
    %0 = vector.load %arg1[%c0, %c0_0] : memref<8x64xf32, #tpu.memory_space<vmem>>, vector<8x64xf32>
    %1 = arith.truncf %0 : vector<8x64xf32> to vector<8x64xbf16>
    %c0_1 = arith.constant 0 : index
    %c0_2 = arith.constant 0 : index
    %2 = vector.load %arg2[%c0_1, %c0_2] : memref<64x32xbf16, #tpu.memory_space<vmem>>, vector<64x32xbf16>
    %cst = arith.constant dense<0.000000e+00> : vector<8x32xf32>
    %3 = tpu.matmul %1, %2, %cst {dimension_numbers = #tpu.dot_dimension_numbers<[1], [0], [0], [1], [0, 0, 1, 1], [], []>} : vector<8x64xbf16>, vector<64x32xbf16>, vector<8x32xf32> -> vector<8x32xf32>
    %c0_3 = arith.constant 0 : index
    %c0_4 = arith.constant 0 : index
    %4 = vector.load %arg3[%c0_3, %c0_4] : memref<1x32xf32, #tpu.memory_space<vmem>>, vector<1x32xf32>
    %5 = vector.broadcast %4 : vector<1x32xf32> to vector<8x32xf32>
    %6 = arith.addf %3, %5 : vector<8x32xf32>
    %c0_5 = arith.constant 0 : index
    %c0_6 = arith.constant 0 : index
    %7 = vector.load %arg4[%c0_5, %c0_6] : memref<1x32xf32, #tpu.memory_space<vmem>>, vector<1x32xf32>
    %c0_7 = arith.constant 0 : index
    %c0_8 = arith.constant 0 : index
    %8 = vector.load %arg5[%c0_7, %c0_8] : memref<1x32xf32, #tpu.memory_space<vmem>>, vector<1x32xf32>
    %cst_9 = arith.constant dense<0.000000e+00> : vector<8xf32>
    %9 = vector.multi_reduction <add>, %6, %cst_9 [1] : vector<8x32xf32> to vector<8xf32>
    %10 = vector.shape_cast %9 : vector<8xf32> to vector<8x1xf32>
    %11 = arith.mulf %6, %6 : vector<8x32xf32>
    %cst_10 = arith.constant dense<0.000000e+00> : vector<8xf32>
    %12 = vector.multi_reduction <add>, %11, %cst_10 [1] : vector<8x32xf32> to vector<8xf32>
    %13 = vector.shape_cast %12 : vector<8xf32> to vector<8x1xf32>
    %cst_11 = arith.constant 3.125000e-02 : f32
    %14 = vector.broadcast %cst_11 : f32 to vector<8x1xf32>
    %15 = arith.mulf %10, %14 : vector<8x1xf32>
    %cst_12 = arith.constant 3.125000e-02 : f32
    %16 = vector.broadcast %cst_12 : f32 to vector<8x1xf32>
    %17 = arith.mulf %13, %16 : vector<8x1xf32>
    %18 = arith.mulf %15, %15 : vector<8x1xf32>
    %19 = arith.subf %17, %18 : vector<8x1xf32>
    %cst_13 = arith.constant 0.000000e+00 : f32
    %20 = vector.broadcast %cst_13 : f32 to vector<8x1xf32>
    %21 = arith.maximumf %19, %20 : vector<8x1xf32>
    %cst_14 = arith.constant 9.99999974E-6 : f32
    %22 = vector.broadcast %cst_14 : f32 to vector<8x1xf32>
    %23 = arith.addf %21, %22 : vector<8x1xf32>
    %24 = math.rsqrt %23 : vector<8x1xf32>
    %25 = vector.broadcast %15 : vector<8x1xf32> to vector<8x32xf32>
    %26 = arith.subf %6, %25 : vector<8x32xf32>
    %27 = vector.broadcast %24 : vector<8x1xf32> to vector<8x32xf32>
    %28 = arith.mulf %26, %27 : vector<8x32xf32>
    %29 = vector.broadcast %7 : vector<1x32xf32> to vector<8x32xf32>
    %30 = arith.mulf %28, %29 : vector<8x32xf32>
    %31 = vector.broadcast %8 : vector<1x32xf32> to vector<8x32xf32>
    %32 = arith.addf %30, %31 : vector<8x32xf32>
    %cst_15 = arith.constant 5.000000e-01 : f32
    %33 = vector.broadcast %cst_15 : f32 to vector<8x32xf32>
    %34 = arith.mulf %33, %32 : vector<8x32xf32>
    %cst_16 = arith.constant 4.471500e-02 : f32
    %35 = vector.broadcast %cst_16 : f32 to vector<8x32xf32>
    %36 = arith.mulf %35, %32 : vector<8x32xf32>
    %37 = arith.mulf %36, %32 : vector<8x32xf32>
    %38 = arith.mulf %37, %32 : vector<8x32xf32>
    %39 = arith.addf %32, %38 : vector<8x32xf32>
    %cst_17 = arith.constant 0.797884583 : f32
    %40 = vector.broadcast %cst_17 : f32 to vector<8x32xf32>
    %41 = arith.mulf %40, %39 : vector<8x32xf32>
    %42 = math.tanh %41 : vector<8x32xf32>
    %cst_18 = arith.constant 1.000000e+00 : f32
    %43 = vector.broadcast %cst_18 : f32 to vector<8x32xf32>
    %44 = arith.addf %43, %42 : vector<8x32xf32>
    %45 = arith.mulf %34, %44 : vector<8x32xf32>
    %c0_19 = arith.constant 0 : index
    %c0_20 = arith.constant 0 : index
    %46 = vector.load %arg8[%c0_19, %c0_20] : memref<1x32xf32, #tpu.memory_space<vmem>>, vector<1x32xf32>
    %c0_21 = arith.constant 0 : index
    %c0_22 = arith.constant 0 : index
    %47 = vector.load %arg9[%c0_21, %c0_22] : memref<1x32xf32, #tpu.memory_space<vmem>>, vector<1x32xf32>
    %cst_23 = arith.constant dense<0.000000e+00> : vector<8xf32>
    %48 = vector.multi_reduction <add>, %45, %cst_23 [1] : vector<8x32xf32> to vector<8xf32>
    %49 = vector.shape_cast %48 : vector<8xf32> to vector<8x1xf32>
    %50 = arith.mulf %45, %45 : vector<8x32xf32>
    %cst_24 = arith.constant dense<0.000000e+00> : vector<8xf32>
    %51 = vector.multi_reduction <add>, %50, %cst_24 [1] : vector<8x32xf32> to vector<8xf32>
    %52 = vector.shape_cast %51 : vector<8xf32> to vector<8x1xf32>
    %cst_25 = arith.constant 3.125000e-02 : f32
    %53 = vector.broadcast %cst_25 : f32 to vector<8x1xf32>
    %54 = arith.mulf %49, %53 : vector<8x1xf32>
    %cst_26 = arith.constant 3.125000e-02 : f32
    %55 = vector.broadcast %cst_26 : f32 to vector<8x1xf32>
    %56 = arith.mulf %52, %55 : vector<8x1xf32>
    %57 = arith.mulf %54, %54 : vector<8x1xf32>
    %58 = arith.subf %56, %57 : vector<8x1xf32>
    %cst_27 = arith.constant 0.000000e+00 : f32
    %59 = vector.broadcast %cst_27 : f32 to vector<8x1xf32>
    %60 = arith.maximumf %58, %59 : vector<8x1xf32>
    %cst_28 = arith.constant 9.99999974E-6 : f32
    %61 = vector.broadcast %cst_28 : f32 to vector<8x1xf32>
    %62 = arith.addf %60, %61 : vector<8x1xf32>
    %63 = math.rsqrt %62 : vector<8x1xf32>
    %64 = vector.broadcast %54 : vector<8x1xf32> to vector<8x32xf32>
    %65 = arith.subf %45, %64 : vector<8x32xf32>
    %66 = vector.broadcast %63 : vector<8x1xf32> to vector<8x32xf32>
    %67 = arith.mulf %65, %66 : vector<8x32xf32>
    %68 = vector.broadcast %46 : vector<1x32xf32> to vector<8x32xf32>
    %69 = arith.mulf %67, %68 : vector<8x32xf32>
    %70 = vector.broadcast %47 : vector<1x32xf32> to vector<8x32xf32>
    %71 = arith.addf %69, %70 : vector<8x32xf32>
    %72 = arith.truncf %71 : vector<8x32xf32> to vector<8x32xbf16>
    %c0_29 = arith.constant 0 : index
    %c0_30 = arith.constant 0 : index
    %73 = vector.load %arg6[%c0_29, %c0_30] : memref<32x32xbf16, #tpu.memory_space<vmem>>, vector<32x32xbf16>
    %cst_31 = arith.constant dense<0.000000e+00> : vector<8x32xf32>
    %74 = tpu.matmul %72, %73, %cst_31 {dimension_numbers = #tpu.dot_dimension_numbers<[1], [0], [0], [1], [0, 0, 1, 1], [], []>} : vector<8x32xbf16>, vector<32x32xbf16>, vector<8x32xf32> -> vector<8x32xf32>
    %c0_32 = arith.constant 0 : index
    %c0_33 = arith.constant 0 : index
    %75 = vector.load %arg7[%c0_32, %c0_33] : memref<1x32xf32, #tpu.memory_space<vmem>>, vector<1x32xf32>
    %76 = vector.broadcast %75 : vector<1x32xf32> to vector<8x32xf32>
    %77 = arith.addf %74, %76 : vector<8x32xf32>
    %cst_34 = arith.constant 5.000000e-01 : f32
    %78 = vector.broadcast %cst_34 : f32 to vector<8x32xf32>
    %79 = arith.mulf %78, %77 : vector<8x32xf32>
    %cst_35 = arith.constant 4.471500e-02 : f32
    %80 = vector.broadcast %cst_35 : f32 to vector<8x32xf32>
    %81 = arith.mulf %80, %77 : vector<8x32xf32>
    %82 = arith.mulf %81, %77 : vector<8x32xf32>
    %83 = arith.mulf %82, %77 : vector<8x32xf32>
    %84 = arith.addf %77, %83 : vector<8x32xf32>
    %cst_36 = arith.constant 0.797884583 : f32
    %85 = vector.broadcast %cst_36 : f32 to vector<8x32xf32>
    %86 = arith.mulf %85, %84 : vector<8x32xf32>
    %87 = math.tanh %86 : vector<8x32xf32>
    %cst_37 = arith.constant 1.000000e+00 : f32
    %88 = vector.broadcast %cst_37 : f32 to vector<8x32xf32>
    %89 = arith.addf %88, %87 : vector<8x32xf32>
    %90 = arith.mulf %79, %89 : vector<8x32xf32>
    %91 = arith.addf %45, %90 : vector<8x32xf32>
    %c0_38 = arith.constant 0 : index
    %c0_39 = arith.constant 0 : index
    %92 = vector.load %arg12[%c0_38, %c0_39] : memref<1x32xf32, #tpu.memory_space<vmem>>, vector<1x32xf32>
    %c0_40 = arith.constant 0 : index
    %c0_41 = arith.constant 0 : index
    %93 = vector.load %arg13[%c0_40, %c0_41] : memref<1x32xf32, #tpu.memory_space<vmem>>, vector<1x32xf32>
    %cst_42 = arith.constant dense<0.000000e+00> : vector<8xf32>
    %94 = vector.multi_reduction <add>, %91, %cst_42 [1] : vector<8x32xf32> to vector<8xf32>
    %95 = vector.shape_cast %94 : vector<8xf32> to vector<8x1xf32>
    %96 = arith.mulf %91, %91 : vector<8x32xf32>
    %cst_43 = arith.constant dense<0.000000e+00> : vector<8xf32>
    %97 = vector.multi_reduction <add>, %96, %cst_43 [1] : vector<8x32xf32> to vector<8xf32>
    %98 = vector.shape_cast %97 : vector<8xf32> to vector<8x1xf32>
    %cst_44 = arith.constant 3.125000e-02 : f32
    %99 = vector.broadcast %cst_44 : f32 to vector<8x1xf32>
    %100 = arith.mulf %95, %99 : vector<8x1xf32>
    %cst_45 = arith.constant 3.125000e-02 : f32
    %101 = vector.broadcast %cst_45 : f32 to vector<8x1xf32>
    %102 = arith.mulf %98, %101 : vector<8x1xf32>
    %103 = arith.mulf %100, %100 : vector<8x1xf32>
    %104 = arith.subf %102, %103 : vector<8x1xf32>
    %cst_46 = arith.constant 0.000000e+00 : f32
    %105 = vector.broadcast %cst_46 : f32 to vector<8x1xf32>
    %106 = arith.maximumf %104, %105 : vector<8x1xf32>
    %cst_47 = arith.constant 9.99999974E-6 : f32
    %107 = vector.broadcast %cst_47 : f32 to vector<8x1xf32>
    %108 = arith.addf %106, %107 : vector<8x1xf32>
    %109 = math.rsqrt %108 : vector<8x1xf32>
    %110 = vector.broadcast %100 : vector<8x1xf32> to vector<8x32xf32>
    %111 = arith.subf %91, %110 : vector<8x32xf32>
    %112 = vector.broadcast %109 : vector<8x1xf32> to vector<8x32xf32>
    %113 = arith.mulf %111, %112 : vector<8x32xf32>
    %114 = vector.broadcast %92 : vector<1x32xf32> to vector<8x32xf32>
    %115 = arith.mulf %113, %114 : vector<8x32xf32>
    %116 = vector.broadcast %93 : vector<1x32xf32> to vector<8x32xf32>
    %117 = arith.addf %115, %116 : vector<8x32xf32>
    %118 = arith.truncf %117 : vector<8x32xf32> to vector<8x32xbf16>
    %c0_48 = arith.constant 0 : index
    %c0_49 = arith.constant 0 : index
    %119 = vector.load %arg10[%c0_48, %c0_49] : memref<32x32xbf16, #tpu.memory_space<vmem>>, vector<32x32xbf16>
    %cst_50 = arith.constant dense<0.000000e+00> : vector<8x32xf32>
    %120 = tpu.matmul %118, %119, %cst_50 {dimension_numbers = #tpu.dot_dimension_numbers<[1], [0], [0], [1], [0, 0, 1, 1], [], []>} : vector<8x32xbf16>, vector<32x32xbf16>, vector<8x32xf32> -> vector<8x32xf32>
    %c0_51 = arith.constant 0 : index
    %c0_52 = arith.constant 0 : index
    %121 = vector.load %arg11[%c0_51, %c0_52] : memref<1x32xf32, #tpu.memory_space<vmem>>, vector<1x32xf32>
    %122 = vector.broadcast %121 : vector<1x32xf32> to vector<8x32xf32>
    %123 = arith.addf %120, %122 : vector<8x32xf32>
    %cst_53 = arith.constant 5.000000e-01 : f32
    %124 = vector.broadcast %cst_53 : f32 to vector<8x32xf32>
    %125 = arith.mulf %124, %123 : vector<8x32xf32>
    %cst_54 = arith.constant 4.471500e-02 : f32
    %126 = vector.broadcast %cst_54 : f32 to vector<8x32xf32>
    %127 = arith.mulf %126, %123 : vector<8x32xf32>
    %128 = arith.mulf %127, %123 : vector<8x32xf32>
    %129 = arith.mulf %128, %123 : vector<8x32xf32>
    %130 = arith.addf %123, %129 : vector<8x32xf32>
    %cst_55 = arith.constant 0.797884583 : f32
    %131 = vector.broadcast %cst_55 : f32 to vector<8x32xf32>
    %132 = arith.mulf %131, %130 : vector<8x32xf32>
    %133 = math.tanh %132 : vector<8x32xf32>
    %cst_56 = arith.constant 1.000000e+00 : f32
    %134 = vector.broadcast %cst_56 : f32 to vector<8x32xf32>
    %135 = arith.addf %134, %133 : vector<8x32xf32>
    %136 = arith.mulf %125, %135 : vector<8x32xf32>
    %137 = arith.addf %91, %136 : vector<8x32xf32>
    %138 = arith.truncf %137 : vector<8x32xf32> to vector<8x32xbf16>
    %c0_57 = arith.constant 0 : index
    %c0_58 = arith.constant 0 : index
    %139 = vector.load %arg14[%c0_57, %c0_58] : memref<32x128xbf16, #tpu.memory_space<vmem>>, vector<32x128xbf16>
    %cst_59 = arith.constant dense<0.000000e+00> : vector<8x128xf32>
    %140 = tpu.matmul %138, %139, %cst_59 {dimension_numbers = #tpu.dot_dimension_numbers<[1], [0], [0], [1], [0, 0, 1, 1], [], []>} : vector<8x32xbf16>, vector<32x128xbf16>, vector<8x128xf32> -> vector<8x128xf32>
    %c0_60 = arith.constant 0 : index
    %c0_61 = arith.constant 0 : index
    %141 = vector.load %arg15[%c0_60, %c0_61] : memref<1x128xf32, #tpu.memory_space<vmem>>, vector<1x128xf32>
    %142 = vector.broadcast %141 : vector<1x128xf32> to vector<8x128xf32>
    %143 = arith.addf %140, %142 : vector<8x128xf32>
    %c0_62 = arith.constant 0 : index
    %c0_63 = arith.constant 0 : index
    %144 = vector.load %arg16[%c0_62, %c0_63] : memref<8x128xf32, #tpu.memory_space<vmem>>, vector<8x128xf32>
    tpu.vector_store %arg16[%c0_62, %c0_63], %143 {strides = array<i32>} : memref<8x128xf32, #tpu.memory_space<vmem>>, vector<8x128xf32>,
    return
  }
  func.func @transform_0(%arg0: i32) -> (i32, i32) {
    %c0_i32 = arith.constant 0 : i32
    %c0_i32_0 = arith.constant 0 : i32
    return %arg0, %c0_i32 : i32, i32
  }
  func.func @transform_1(%arg0: i32) -> (i32, i32) {
    %c0_i32 = arith.constant 0 : i32
    %c0_i32_0 = arith.constant 0 : i32
    %c0_i32_1 = arith.constant 0 : i32
    return %c0_i32, %c0_i32_0 : i32, i32
  }
  func.func @transform_2(%arg0: i32) -> (i32, i32) {
    %c0_i32 = arith.constant 0 : i32
    %c0_i32_0 = arith.constant 0 : i32
    %c0_i32_1 = arith.constant 0 : i32
    return %c0_i32, %c0_i32_0 : i32, i32
  }
  func.func @transform_3(%arg0: i32) -> (i32, i32) {
    %c0_i32 = arith.constant 0 : i32
    %c0_i32_0 = arith.constant 0 : i32
    %c0_i32_1 = arith.constant 0 : i32
    return %c0_i32, %c0_i32_0 : i32, i32
  }
  func.func @transform_4(%arg0: i32) -> (i32, i32) {
    %c0_i32 = arith.constant 0 : i32
    %c0_i32_0 = arith.constant 0 : i32
    %c0_i32_1 = arith.constant 0 : i32
    return %c0_i32, %c0_i32_0 : i32, i32
  }
  func.func @transform_5(%arg0: i32) -> (i32, i32) {
    %c0_i32 = arith.constant 0 : i32
    %c0_i32_0 = arith.constant 0 : i32
    %c0_i32_1 = arith.constant 0 : i32
    return %c0_i32, %c0_i32_0 : i32, i32
  }
  func.func @transform_6(%arg0: i32) -> (i32, i32) {
    %c0_i32 = arith.constant 0 : i32
    %c0_i32_0 = arith.constant 0 : i32
    %c0_i32_1 = arith.constant 0 : i32
    return %c0_i32, %c0_i32_0 : i32, i32
  }
  func.func @transform_7(%arg0: i32) -> (i32, i32) {
    %c0_i32 = arith.constant 0 : i32
    %c0_i32_0 = arith.constant 0 : i32
    %c0_i32_1 = arith.constant 0 : i32
    return %c0_i32, %c0_i32_0 : i32, i32
  }
  func.func @transform_8(%arg0: i32) -> (i32, i32) {
    %c0_i32 = arith.constant 0 : i32
    %c0_i32_0 = arith.constant 0 : i32
    %c0_i32_1 = arith.constant 0 : i32
    return %c0_i32, %c0_i32_0 : i32, i32
  }
  func.func @transform_9(%arg0: i32) -> (i32, i32) {
    %c0_i32 = arith.constant 0 : i32
    %c0_i32_0 = arith.constant 0 : i32
    %c0_i32_1 = arith.constant 0 : i32
    return %c0_i32, %c0_i32_0 : i32, i32
  }
  func.func @transform_10(%arg0: i32) -> (i32, i32) {
    %c0_i32 = arith.constant 0 : i32
    %c0_i32_0 = arith.constant 0 : i32
    %c0_i32_1 = arith.constant 0 : i32
    return %c0_i32, %c0_i32_0 : i32, i32
  }
  func.func @transform_11(%arg0: i32) -> (i32, i32) {
    %c0_i32 = arith.constant 0 : i32
    %c0_i32_0 = arith.constant 0 : i32
    %c0_i32_1 = arith.constant 0 : i32
    return %c0_i32, %c0_i32_0 : i32, i32
  }
  func.func @transform_12(%arg0: i32) -> (i32, i32) {
    %c0_i32 = arith.constant 0 : i32
    %c0_i32_0 = arith.constant 0 : i32
    %c0_i32_1 = arith.constant 0 : i32
    return %c0_i32, %c0_i32_0 : i32, i32
  }
  func.func @transform_13(%arg0: i32) -> (i32, i32) {
    %c0_i32 = arith.constant 0 : i32
    %c0_i32_0 = arith.constant 0 : i32
    %c0_i32_1 = arith.constant 0 : i32
    return %c0_i32, %c0_i32_0 : i32, i32
  }
  func.func @transform_14(%arg0: i32) -> (i32, i32) {
    %c0_i32 = arith.constant 0 : i32
    %c0_i32_0 = arith.constant 0 : i32
    %c0_i32_1 = arith.constant 0 : i32
    return %c0_i32, %c0_i32_0 : i32, i32
  }
  func.func @transform_15(%arg0: i32) -> (i32, i32) {
    %c0_i32 = arith.constant 0 : i32
    %c0_i32_0 = arith.constant 0 : i32
    return %arg0, %c0_i32 : i32, i32
  }
}

module attributes {stable_mosaic.version = 11 : i64} {
  func.func @_head_kernel(%arg0: i32, %arg1: memref<8x64xf32, #tpu.memory_space<vmem>>, %arg2: memref<64x32xbf16, #tpu.memory_space<vmem>>, %arg3: memref<1x32xf32, #tpu.memory_space<vmem>>, %arg4: memref<1x32xf32, #tpu.memory_space<vmem>>, %arg5: memref<1x32xf32, #tpu.memory_space<vmem>>, %arg6: memref<32x32xbf16, #tpu.memory_space<vmem>>, %arg7: memref<1x32xf32, #tpu.memory_space<vmem>>, %arg8: memref<1x32xf32, #tpu.memory_space<vmem>>, %arg9: memref<1x32xf32, #tpu.memory_space<vmem>>, %arg10: memref<32x32xbf16, #tpu.memory_space<vmem>>, %arg11: memref<1x32xf32, #tpu.memory_space<vmem>>, %arg12: memref<1x32xf32, #tpu.memory_space<vmem>>, %arg13: memref<1x32xf32, #tpu.memory_space<vmem>>, %arg14: memref<32x128xbf16, #tpu.memory_space<vmem>>, %arg15: memref<1x128xf32, #tpu.memory_space<vmem>>, %arg16: memref<8x128xf32, #tpu.memory_space<vmem>>) attributes {dimension_semantics = [#tpu.dimension_semantics<parallel>], iteration_bounds = array<i64: 1>, scalar_prefetch = 0 : i64, scratch_operands = 0 : i64, tpu.core_type = #tpu.core_type<tc>, window_params = [{transform_indices = @transform_0, window_bounds = array<i64: 8, 64>}, {pipeline_mode = #tpu.pipeline_mode<synchronous>, transform_indices = @transform_1, window_bounds = array<i64: 64, 32>}, {pipeline_mode = #tpu.pipeline_mode<synchronous>, transform_indices = @transform_2, window_bounds = array<i64: 1, 32>}, {pipeline_mode = #tpu.pipeline_mode<synchronous>, transform_indices = @transform_3, window_bounds = array<i64: 1, 32>}, {pipeline_mode = #tpu.pipeline_mode<synchronous>, transform_indices = @transform_4, window_bounds = array<i64: 1, 32>}, {pipeline_mode = #tpu.pipeline_mode<synchronous>, transform_indices = @transform_5, window_bounds = array<i64: 32, 32>}, {pipeline_mode = #tpu.pipeline_mode<synchronous>, transform_indices = @transform_6, window_bounds = array<i64: 1, 32>}, {pipeline_mode = #tpu.pipeline_mode<synchronous>, transform_indices = @transform_7, window_bounds = array<i64: 1, 32>}, {pipeline_mode = #tpu.pipeline_mode<synchronous>, transform_indices = @transform_8, window_bounds = array<i64: 1, 32>}, {pipeline_mode = #tpu.pipeline_mode<synchronous>, transform_indices = @transform_9, window_bounds = array<i64: 32, 32>}, {pipeline_mode = #tpu.pipeline_mode<synchronous>, transform_indices = @transform_10, window_bounds = array<i64: 1, 32>}, {pipeline_mode = #tpu.pipeline_mode<synchronous>, transform_indices = @transform_11, window_bounds = array<i64: 1, 32>}, {pipeline_mode = #tpu.pipeline_mode<synchronous>, transform_indices = @transform_12, window_bounds = array<i64: 1, 32>}, {pipeline_mode = #tpu.pipeline_mode<synchronous>, transform_indices = @transform_13, window_bounds = array<i64: 32, 128>}, {pipeline_mode = #tpu.pipeline_mode<synchronous>, transform_indices = @transform_14, window_bounds = array<i64: 1, 128>}, {transform_indices = @transform_15, window_bounds = array<i64: 8, 128>}]} {
    %c0 = arith.constant 0 : index
    %c0_0 = arith.constant 0 : index
    %0 = vector.load %arg1[%c0, %c0_0] : memref<8x64xf32, #tpu.memory_space<vmem>>, vector<8x64xf32>
    %1 = arith.truncf %0 : vector<8x64xf32> to vector<8x64xbf16>
    %c0_1 = arith.constant 0 : index
    %c0_2 = arith.constant 0 : index
    %2 = vector.load %arg2[%c0_1, %c0_2] : memref<64x32xbf16, #tpu.memory_space<vmem>>, vector<64x32xbf16>
    %cst = arith.constant dense<0.000000e+00> : vector<8x32xf32>
    %3 = tpu.matmul %1, %2, %cst {dimension_numbers = #tpu.dot_dimension_numbers<[1], [0], [0], [1], [0, 0, 1, 1], [], []>} : vector<8x64xbf16>, vector<64x32xbf16>, vector<8x32xf32> -> vector<8x32xf32>
    %c0_3 = arith.constant 0 : index
    %c0_4 = arith.constant 0 : index
    %4 = vector.load %arg3[%c0_3, %c0_4] : memref<1x32xf32, #tpu.memory_space<vmem>>, vector<1x32xf32>
    %5 = vector.broadcast %4 : vector<1x32xf32> to vector<8x32xf32>
    %6 = arith.addf %3, %5 : vector<8x32xf32>
    %c0_5 = arith.constant 0 : index
    %c0_6 = arith.constant 0 : index
    %7 = vector.load %arg4[%c0_5, %c0_6] : memref<1x32xf32, #tpu.memory_space<vmem>>, vector<1x32xf32>
    %c0_7 = arith.constant 0 : index
    %c0_8 = arith.constant 0 : index
    %8 = vector.load %arg5[%c0_7, %c0_8] : memref<1x32xf32, #tpu.memory_space<vmem>>, vector<1x32xf32>
    %cst_9 = arith.constant dense<0.000000e+00> : vector<8xf32>
    %9 = vector.multi_reduction <add>, %6, %cst_9 [1] : vector<8x32xf32> to vector<8xf32>
    %10 = vector.shape_cast %9 : vector<8xf32> to vector<8x1xf32>
    %11 = arith.mulf %6, %6 : vector<8x32xf32>
    %cst_10 = arith.constant dense<0.000000e+00> : vector<8xf32>
    %12 = vector.multi_reduction <add>, %11, %cst_10 [1] : vector<8x32xf32> to vector<8xf32>
    %13 = vector.shape_cast %12 : vector<8xf32> to vector<8x1xf32>
    %cst_11 = arith.constant 3.125000e-02 : f32
    %14 = vector.broadcast %cst_11 : f32 to vector<8x1xf32>
    %15 = arith.mulf %10, %14 : vector<8x1xf32>
    %cst_12 = arith.constant 3.125000e-02 : f32
    %16 = vector.broadcast %cst_12 : f32 to vector<8x1xf32>
    %17 = arith.mulf %13, %16 : vector<8x1xf32>
    %18 = arith.mulf %15, %15 : vector<8x1xf32>
    %19 = arith.subf %17, %18 : vector<8x1xf32>
    %cst_13 = arith.constant 0.000000e+00 : f32
    %20 = vector.broadcast %cst_13 : f32 to vector<8x1xf32>
    %21 = arith.maximumf %19, %20 : vector<8x1xf32>
    %cst_14 = arith.constant 9.99999974E-6 : f32
    %22 = vector.broadcast %cst_14 : f32 to vector<8x1xf32>
    %23 = arith.addf %21, %22 : vector<8x1xf32>
    %24 = math.rsqrt %23 : vector<8x1xf32>
    %25 = vector.broadcast %15 : vector<8x1xf32> to vector<8x32xf32>
    %26 = arith.subf %6, %25 : vector<8x32xf32>
    %27 = vector.broadcast %24 : vector<8x1xf32> to vector<8x32xf32>
    %28 = arith.mulf %26, %27 : vector<8x32xf32>
    %29 = vector.broadcast %7 : vector<1x32xf32> to vector<8x32xf32>
    %30 = arith.mulf %28, %29 : vector<8x32xf32>
    %31 = vector.broadcast %8 : vector<1x32xf32> to vector<8x32xf32>
    %32 = arith.addf %30, %31 : vector<8x32xf32>
    %cst_15 = arith.constant 5.000000e-01 : f32
    %33 = vector.broadcast %cst_15 : f32 to vector<8x32xf32>
    %34 = arith.mulf %33, %32 : vector<8x32xf32>
    %cst_16 = arith.constant 4.471500e-02 : f32
    %35 = vector.broadcast %cst_16 : f32 to vector<8x32xf32>
    %36 = arith.mulf %35, %32 : vector<8x32xf32>
    %37 = arith.mulf %36, %32 : vector<8x32xf32>
    %38 = arith.mulf %37, %32 : vector<8x32xf32>
    %39 = arith.addf %32, %38 : vector<8x32xf32>
    %cst_17 = arith.constant 0.797884583 : f32
    %40 = vector.broadcast %cst_17 : f32 to vector<8x32xf32>
    %41 = arith.mulf %40, %39 : vector<8x32xf32>
    %42 = math.tanh %41 : vector<8x32xf32>
    %cst_18 = arith.constant 1.000000e+00 : f32
    %43 = vector.broadcast %cst_18 : f32 to vector<8x32xf32>
    %44 = arith.addf %43, %42 : vector<8x32xf32>
    %45 = arith.mulf %34, %44 : vector<8x32xf32>
    %c0_19 = arith.constant 0 : index
    %c0_20 = arith.constant 0 : index
    %46 = vector.load %arg8[%c0_19, %c0_20] : memref<1x32xf32, #tpu.memory_space<vmem>>, vector<1x32xf32>
    %c0_21 = arith.constant 0 : index
    %c0_22 = arith.constant 0 : index
    %47 = vector.load %arg9[%c0_21, %c0_22] : memref<1x32xf32, #tpu.memory_space<vmem>>, vector<1x32xf32>
    %cst_23 = arith.constant dense<0.000000e+00> : vector<8xf32>
    %48 = vector.multi_reduction <add>, %45, %cst_23 [1] : vector<8x32xf32> to vector<8xf32>
    %49 = vector.shape_cast %48 : vector<8xf32> to vector<8x1xf32>
    %50 = arith.mulf %45, %45 : vector<8x32xf32>
    %cst_24 = arith.constant dense<0.000000e+00> : vector<8xf32>
    %51 = vector.multi_reduction <add>, %50, %cst_24 [1] : vector<8x32xf32> to vector<8xf32>
    %52 = vector.shape_cast %51 : vector<8xf32> to vector<8x1xf32>
    %cst_25 = arith.constant 3.125000e-02 : f32
    %53 = vector.broadcast %cst_25 : f32 to vector<8x1xf32>
    %54 = arith.mulf %49, %53 : vector<8x1xf32>
    %cst_26 = arith.constant 3.125000e-02 : f32
    %55 = vector.broadcast %cst_26 : f32 to vector<8x1xf32>
    %56 = arith.mulf %52, %55 : vector<8x1xf32>
    %57 = arith.mulf %54, %54 : vector<8x1xf32>
    %58 = arith.subf %56, %57 : vector<8x1xf32>
    %cst_27 = arith.constant 0.000000e+00 : f32
    %59 = vector.broadcast %cst_27 : f32 to vector<8x1xf32>
    %60 = arith.maximumf %58, %59 : vector<8x1xf32>
    %cst_28 = arith.constant 9.99999974E-6 : f32
    %61 = vector.broadcast %cst_28 : f32 to vector<8x1xf32>
    %62 = arith.addf %60, %61 : vector<8x1xf32>
    %63 = math.rsqrt %62 : vector<8x1xf32>
    %64 = vector.broadcast %54 : vector<8x1xf32> to vector<8x32xf32>
    %65 = arith.subf %45, %64 : vector<8x32xf32>
    %66 = vector.broadcast %63 : vector<8x1xf32> to vector<8x32xf32>
    %67 = arith.mulf %65, %66 : vector<8x32xf32>
    %68 = vector.broadcast %46 : vector<1x32xf32> to vector<8x32xf32>
    %69 = arith.mulf %67, %68 : vector<8x32xf32>
    %70 = vector.broadcast %47 : vector<1x32xf32> to vector<8x32xf32>
    %71 = arith.addf %69, %70 : vector<8x32xf32>
    %72 = arith.truncf %71 : vector<8x32xf32> to vector<8x32xbf16>
    %c0_29 = arith.constant 0 : index
    %c0_30 = arith.constant 0 : index
    %73 = vector.load %arg6[%c0_29, %c0_30] : memref<32x32xbf16, #tpu.memory_space<vmem>>, vector<32x32xbf16>
    %cst_31 = arith.constant dense<0.000000e+00> : vector<8x32xf32>
    %74 = tpu.matmul %72, %73, %cst_31 {dimension_numbers = #tpu.dot_dimension_numbers<[1], [0], [0], [1], [0, 0, 1, 1], [], []>} : vector<8x32xbf16>, vector<32x32xbf16>, vector<8x32xf32> -> vector<8x32xf32>
    %c0_32 = arith.constant 0 : index
    %c0_33 = arith.constant 0 : index
    %75 = vector.load %arg7[%c0_32, %c0_33] : memref<1x32xf32, #tpu.memory_space<vmem>>, vector<1x32xf32>
    %76 = vector.broadcast %75 : vector<1x32xf32> to vector<8x32xf32>
    %77 = arith.addf %74, %76 : vector<8x32xf32>
    %cst_34 = arith.constant 5.000000e-01 : f32
    %78 = vector.broadcast %cst_34 : f32 to vector<8x32xf32>
    %79 = arith.mulf %78, %77 : vector<8x32xf32>
    %cst_35 = arith.constant 4.471500e-02 : f32
    %80 = vector.broadcast %cst_35 : f32 to vector<8x32xf32>
    %81 = arith.mulf %80, %77 : vector<8x32xf32>
    %82 = arith.mulf %81, %77 : vector<8x32xf32>
    %83 = arith.mulf %82, %77 : vector<8x32xf32>
    %84 = arith.addf %77, %83 : vector<8x32xf32>
    %cst_36 = arith.constant 0.797884583 : f32
    %85 = vector.broadcast %cst_36 : f32 to vector<8x32xf32>
    %86 = arith.mulf %85, %84 : vector<8x32xf32>
    %87 = math.tanh %86 : vector<8x32xf32>
    %cst_37 = arith.constant 1.000000e+00 : f32
    %88 = vector.broadcast %cst_37 : f32 to vector<8x32xf32>
    %89 = arith.addf %88, %87 : vector<8x32xf32>
    %90 = arith.mulf %79, %89 : vector<8x32xf32>
    %91 = arith.addf %45, %90 : vector<8x32xf32>
    %c0_38 = arith.constant 0 : index
    %c0_39 = arith.constant 0 : index
    %92 = vector.load %arg12[%c0_38, %c0_39] : memref<1x32xf32, #tpu.memory_space<vmem>>, vector<1x32xf32>
    %c0_40 = arith.constant 0 : index
    %c0_41 = arith.constant 0 : index
    %93 = vector.load %arg13[%c0_40, %c0_41] : memref<1x32xf32, #tpu.memory_space<vmem>>, vector<1x32xf32>
    %cst_42 = arith.constant dense<0.000000e+00> : vector<8xf32>
    %94 = vector.multi_reduction <add>, %91, %cst_42 [1] : vector<8x32xf32> to vector<8xf32>
    %95 = vector.shape_cast %94 : vector<8xf32> to vector<8x1xf32>
    %96 = arith.mulf %91, %91 : vector<8x32xf32>
    %cst_43 = arith.constant dense<0.000000e+00> : vector<8xf32>
    %97 = vector.multi_reduction <add>, %96, %cst_43 [1] : vector<8x32xf32> to vector<8xf32>
    %98 = vector.shape_cast %97 : vector<8xf32> to vector<8x1xf32>
    %cst_44 = arith.constant 3.125000e-02 : f32
    %99 = vector.broadcast %cst_44 : f32 to vector<8x1xf32>
    %100 = arith.mulf %95, %99 : vector<8x1xf32>
    %cst_45 = arith.constant 3.125000e-02 : f32
    %101 = vector.broadcast %cst_45 : f32 to vector<8x1xf32>
    %102 = arith.mulf %98, %101 : vector<8x1xf32>
    %103 = arith.mulf %100, %100 : vector<8x1xf32>
    %104 = arith.subf %102, %103 : vector<8x1xf32>
    %cst_46 = arith.constant 0.000000e+00 : f32
    %105 = vector.broadcast %cst_46 : f32 to vector<8x1xf32>
    %106 = arith.maximumf %104, %105 : vector<8x1xf32>
    %cst_47 = arith.constant 9.99999974E-6 : f32
    %107 = vector.broadcast %cst_47 : f32 to vector<8x1xf32>
    %108 = arith.addf %106, %107 : vector<8x1xf32>
    %109 = math.rsqrt %108 : vector<8x1xf32>
    %110 = vector.broadcast %100 : vector<8x1xf32> to vector<8x32xf32>
    %111 = arith.subf %91, %110 : vector<8x32xf32>
    %112 = vector.broadcast %109 : vector<8x1xf32> to vector<8x32xf32>
    %113 = arith.mulf %111, %112 : vector<8x32xf32>
    %114 = vector.broadcast %92 : vector<1x32xf32> to vector<8x32xf32>
    %115 = arith.mulf %113, %114 : vector<8x32xf32>
    %116 = vector.broadcast %93 : vector<1x32xf32> to vector<8x32xf32>
    %117 = arith.addf %115, %116 : vector<8x32xf32>
    %118 = arith.truncf %117 : vector<8x32xf32> to vector<8x32xbf16>
    %c0_48 = arith.constant 0 : index
    %c0_49 = arith.constant 0 : index
    %119 = vector.load %arg10[%c0_48, %c0_49] : memref<32x32xbf16, #tpu.memory_space<vmem>>, vector<32x32xbf16>
    %cst_50 = arith.constant dense<0.000000e+00> : vector<8x32xf32>
    %120 = tpu.matmul %118, %119, %cst_50 {dimension_numbers = #tpu.dot_dimension_numbers<[1], [0], [0], [1], [0, 0, 1, 1], [], []>} : vector<8x32xbf16>, vector<32x32xbf16>, vector<8x32xf32> -> vector<8x32xf32>
    %c0_51 = arith.constant 0 : index
    %c0_52 = arith.constant 0 : index
    %121 = vector.load %arg11[%c0_51, %c0_52] : memref<1x32xf32, #tpu.memory_space<vmem>>, vector<1x32xf32>
    %122 = vector.broadcast %121 : vector<1x32xf32> to vector<8x32xf32>
    %123 = arith.addf %120, %122 : vector<8x32xf32>
    %cst_53 = arith.constant 5.000000e-01 : f32
    %124 = vector.broadcast %cst_53 : f32 to vector<8x32xf32>
    %125 = arith.mulf %124, %123 : vector<8x32xf32>
    %cst_54 = arith.constant 4.471500e-02 : f32
    %126 = vector.broadcast %cst_54 : f32 to vector<8x32xf32>
    %127 = arith.mulf %126, %123 : vector<8x32xf32>
    %128 = arith.mulf %127, %123 : vector<8x32xf32>
    %129 = arith.mulf %128, %123 : vector<8x32xf32>
    %130 = arith.addf %123, %129 : vector<8x32xf32>
    %cst_55 = arith.constant 0.797884583 : f32
    %131 = vector.broadcast %cst_55 : f32 to vector<8x32xf32>
    %132 = arith.mulf %131, %130 : vector<8x32xf32>
    %133 = math.tanh %132 : vector<8x32xf32>
    %cst_56 = arith.constant 1.000000e+00 : f32
    %134 = vector.broadcast %cst_56 : f32 to vector<8x32xf32>
    %135 = arith.addf %134, %133 : vector<8x32xf32>
    %136 = arith.mulf %125, %135 : vector<8x32xf32>
    %137 = arith.addf %91, %136 : vector<8x32xf32>
    %138 = arith.truncf %137 : vector<8x32xf32> to vector<8x32xbf16>
    %c0_57 = arith.constant 0 : index
    %c0_58 = arith.constant 0 : index
    %139 = vector.load %arg14[%c0_57, %c0_58] : memref<32x128xbf16, #tpu.memory_space<vmem>>, vector<32x128xbf16>
    %cst_59 = arith.constant dense<0.000000e+00> : vector<8x128xf32>
    %140 = tpu.matmul %138, %139, %cst_59 {dimension_numbers = #tpu.dot_dimension_numbers<[1], [0], [0], [1], [0, 0, 1, 1], [], []>} : vector<8x32xbf16>, vector<32x128xbf16>, vector<8x128xf32> -> vector<8x128xf32>
    %c0_60 = arith.constant 0 : index
    %c0_61 = arith.constant 0 : index
    %141 = vector.load %arg15[%c0_60, %c0_61] : memref<1x128xf32, #tpu.memory_space<vmem>>, vector<1x128xf32>
    %142 = vector.broadcast %141 : vector<1x128xf32> to vector<8x128xf32>
    %143 = arith.addf %140, %142 : vector<8x128xf32>
    %c0_62 = arith.constant 0 : index
    %c0_63 = arith.constant 0 : index
    %144 = vector.load %arg16[%c0_62, %c0_63] : memref<8x128xf32, #tpu.memory_space<vmem>>, vector<8x128xf32>
    tpu.vector_store %arg16[%c0_62, %c0_63], %143 {strides = array<i32>} : memref<8x128xf32, #tpu.memory_space<vmem>>, vector<8x128xf32>,
    return
  }
  func.func @transform_0(%arg0: i32) -> (i32, i32) {
    %c0_i32 = arith.constant 0 : i32
    %c0_i32_0 = arith.constant 0 : i32
    return %arg0, %c0_i32 : i32, i32
  }
  func.func @transform_1(%arg0: i32) -> (i32, i32) {
    %c0_i32 = arith.constant 0 : i32
    %c0_i32_0 = arith.constant 0 : i32
    %c0_i32_1 = arith.constant 0 : i32
    return %c0_i32, %c0_i32_0 : i32, i32
  }
  func.func @transform_2(%arg0: i32) -> (i32, i32) {
    %c0_i32 = arith.constant 0 : i32
    %c0_i32_0 = arith.constant 0 : i32
    %c0_i32_1 = arith.constant 0 : i32
    return %c0_i32, %c0_i32_0 : i32, i32
  }
  func.func @transform_3(%arg0: i32) -> (i32, i32) {
    %c0_i32 = arith.constant 0 : i32
    %c0_i32_0 = arith.constant 0 : i32
    %c0_i32_1 = arith.constant 0 : i32
    return %c0_i32, %c0_i32_0 : i32, i32
  }
  func.func @transform_4(%arg0: i32) -> (i32, i32) {
    %c0_i32 = arith.constant 0 : i32
    %c0_i32_0 = arith.constant 0 : i32
    %c0_i32_1 = arith.constant 0 : i32
    return %c0_i32, %c0_i32_0 : i32, i32
  }
  func.func @transform_5(%arg0: i32) -> (i32, i32) {
    %c0_i32 = arith.constant 0 : i32
    %c0_i32_0 = arith.constant 0 : i32
    %c0_i32_1 = arith.constant 0 : i32
    return %c0_i32, %c0_i32_0 : i32, i32
  }
  func.func @transform_6(%arg0: i32) -> (i32, i32) {
    %c0_i32 = arith.constant 0 : i32
    %c0_i32_0 = arith.constant 0 : i32
    %c0_i32_1 = arith.constant 0 : i32
    return %c0_i32, %c0_i32_0 : i32, i32
  }
  func.func @transform_7(%arg0: i32) -> (i32, i32) {
    %c0_i32 = arith.constant 0 : i32
    %c0_i32_0 = arith.constant 0 : i32
    %c0_i32_1 = arith.constant 0 : i32
    return %c0_i32, %c0_i32_0 : i32, i32
  }
  func.func @transform_8(%arg0: i32) -> (i32, i32) {
    %c0_i32 = arith.constant 0 : i32
    %c0_i32_0 = arith.constant 0 : i32
    %c0_i32_1 = arith.constant 0 : i32
    return %c0_i32, %c0_i32_0 : i32, i32
  }
  func.func @transform_9(%arg0: i32) -> (i32, i32) {
    %c0_i32 = arith.constant 0 : i32
    %c0_i32_0 = arith.constant 0 : i32
    %c0_i32_1 = arith.constant 0 : i32
    return %c0_i32, %c0_i32_0 : i32, i32
  }
  func.func @transform_10(%arg0: i32) -> (i32, i32) {
    %c0_i32 = arith.constant 0 : i32
    %c0_i32_0 = arith.constant 0 : i32
    %c0_i32_1 = arith.constant 0 : i32
    return %c0_i32, %c0_i32_0 : i32, i32
  }
  func.func @transform_11(%arg0: i32) -> (i32, i32) {
    %c0_i32 = arith.constant 0 : i32
    %c0_i32_0 = arith.constant 0 : i32
    %c0_i32_1 = arith.constant 0 : i32
    return %c0_i32, %c0_i32_0 : i32, i32
  }
  func.func @transform_12(%arg0: i32) -> (i32, i32) {
    %c0_i32 = arith.constant 0 : i32
    %c0_i32_0 = arith.constant 0 : i32
    %c0_i32_1 = arith.constant 0 : i32
    return %c0_i32, %c0_i32_0 : i32, i32
  }
  func.func @transform_13(%arg0: i32) -> (i32, i32) {
    %c0_i32 = arith.constant 0 : i32
    %c0_i32_0 = arith.constant 0 : i32
    %c0_i32_1 = arith.constant 0 : i32
    return %c0_i32, %c0_i32_0 : i32, i32
  }
  func.func @transform_14(%arg0: i32) -> (i32, i32) {
    %c0_i32 = arith.constant 0 : i32
    %c0_i32_0 = arith.constant 0 : i32
    %c0_i32_1 = arith.constant 0 : i32
    return %c0_i32, %c0_i32_0 : i32, i32
  }
  func.func @transform_15(%arg0: i32) -> (i32, i32) {
    %c0_i32 = arith.constant 0 : i32
    %c0_i32_0 = arith.constant 0 : i32
    return %arg0, %c0_i32 : i32, i32
  }
}

</mosaic_0001>

<llo_original>
// kernel: tpu_custom_call.1
$region0: #{tpu_custom_call.1}
  #allocation0 [shape = 'u32[]', space=smem, size = 0x4, offset = 0x4, fixed_abs, tag = 'smem constant byte address 0x4 - core index']
  #allocation1 [shape = 'u32[144,128]{1,0:T(1,128)}', space=vmem, size = 0x12000, scoped, tag = 'internal scratch']
  %s0 = inlined_call_operand.hbm [shape: f32[8,64], index: 0, kind: input, shape index: {}]
  %s1 = inlined_call_operand.vmem [shape: bf16[64,32], index: 1, kind: input, shape index: {}]
  %s2 = inlined_call_operand.vmem [shape: f32[1,32], index: 2, kind: input, shape index: {}]
  %s3 = inlined_call_operand.vmem [shape: f32[1,32], index: 3, kind: input, shape index: {}]
  %s4 = inlined_call_operand.vmem [shape: f32[1,32], index: 4, kind: input, shape index: {}]
  %s5 = inlined_call_operand.vmem [shape: bf16[32,32], index: 5, kind: input, shape index: {}]
  %s6 = inlined_call_operand.vmem [shape: f32[1,32], index: 6, kind: input, shape index: {}]
  %s7 = inlined_call_operand.vmem [shape: f32[1,32], index: 7, kind: input, shape index: {}]
  %s8 = inlined_call_operand.vmem [shape: f32[1,32], index: 8, kind: input, shape index: {}]
  %s9 = inlined_call_operand.vmem [shape: bf16[32,32], index: 9, kind: input, shape index: {}]
  %s10 = inlined_call_operand.vmem [shape: f32[1,32], index: 10, kind: input, shape index: {}]
  %s11 = inlined_call_operand.vmem [shape: f32[1,32], index: 11, kind: input, shape index: {}]
  %s12 = inlined_call_operand.vmem [shape: f32[1,32], index: 12, kind: input, shape index: {}]
  %s13 = inlined_call_operand.vmem [shape: bf16[32,128], index: 13, kind: input, shape index: {}]
  %s14 = inlined_call_operand.vmem [shape: f32[1,128], index: 14, kind: input, shape index: {}]
  %s15 = inlined_call_operand.hbm [shape: f32[8,128], index: 15, kind: output, shape index: {}]
  %s16 = sld [smem:[#allocation0]]
  $region74: #{tpu_custom_call.1} parent=0
    _
  %s18 = ssub.s32 1, %s16
  %s19 = scalar_select 0, %s18, %s16
  $region1: #{tpu_custom_call.1} parent=0
    #allocation2 [shape = 'u8[4096]{0}', space=vmem, size = 0x1000, scoped, tag = 'input window, operand 0, single buffered']
    #allocation3 [shape = 's32[1]{0}', space=sflag, size = 0x4, scoped, tag = 'scoped memory for tpu_custom_call.1']
    #allocation4 [shape = 's32[1]{0}', space=sflag, size = 0x4, scoped, tag = 'scoped memory for tpu_custom_call.1']
    #allocation5 [shape = 'u8[4096]{0}', space=vmem, size = 0x1000, scoped, tag = 'output window, operand 0, single buffered']
    %20 = vsyncpa [#allocation3], 0
    %21 = vsyncpa [#allocation4], 0
    // Predicated region
    $region2: #{tpu_custom_call.1} parent=1 // pred_check
      _
    $region3: #{tpu_custom_call.1} parent=1 // pred_check_branch
      %23 = sbr.rel (0) target = $region5
    $region4: #{tpu_custom_call.1} parent=1 // pred_region
      %s25 = ssub.s32 128, 128
      %26 = vsyncadd [#allocation3], %s25
      %s28 = sshll.u32 [#allocation2], 4
      %s29 = int_to_ptr.vmem [resolvable:$true] %s28
      %31 = dma.hbm_to_vmem [thread:$0]  %s0, 128, %s29, [#allocation3]
    $region5: #{tpu_custom_call.1} parent=1 // pred_fallthru
      _
    // Predicated region
    $region6: #{tpu_custom_call.1} parent=1 // pred_check
      _
    $region7: #{tpu_custom_call.1} parent=1 // pred_check_branch
      %33 = sbr.rel (0) target = $region9
    $region8: #{tpu_custom_call.1} parent=1 // pred_region
      _
    $region9: #{tpu_custom_call.1} parent=1 // pred_fallthru
      _
    // Predicated region
    $region10: #{tpu_custom_call.1} parent=1 // pred_check
      _
    $region11: #{tpu_custom_call.1} parent=1 // pred_check_branch
      %35 = sbr.rel (0) target = $region13
    $region12: #{tpu_custom_call.1} parent=1 // pred_region
      _
    $region13: #{tpu_custom_call.1} parent=1 // pred_fallthru
      _
    // Predicated region
    $region14: #{tpu_custom_call.1} parent=1 // pred_check
      _
    $region15: #{tpu_custom_call.1} parent=1 // pred_check_branch
      %37 = sbr.rel (0) target = $region17
    $region16: #{tpu_custom_call.1} parent=1 // pred_region
      _
    $region17: #{tpu_custom_call.1} parent=1 // pred_fallthru
      _
    // Predicated region
    $region18: #{tpu_custom_call.1} parent=1 // pred_check
      _
    $region19: #{tpu_custom_call.1} parent=1 // pred_check_branch
      %39 = sbr.rel (0) target = $region21
    $region20: #{tpu_custom_call.1} parent=1 // pred_region
      _
    $region21: #{tpu_custom_call.1} parent=1 // pred_fallthru
      _
    // Predicated region
    $region22: #{tpu_custom_call.1} parent=1 // pred_check
      _
    $region23: #{tpu_custom_call.1} parent=1 // pred_check_branch
      %41 = sbr.rel (0) target = $region25
    $region24: #{tpu_custom_call.1} parent=1 // pred_region
      _
    $region25: #{tpu_custom_call.1} parent=1 // pred_fallthru
      _
    // Predicated region
    $region26: #{tpu_custom_call.1} parent=1 // pred_check
      _
    $region27: #{tpu_custom_call.1} parent=1 // pred_check_branch
      %43 = sbr.rel (0) target = $region29
    $region28: #{tpu_custom_call.1} parent=1 // pred_region
      _
    $region29: #{tpu_custom_call.1} parent=1 // pred_fallthru
      _
    // Predicated region
    $region30: #{tpu_custom_call.1} parent=1 // pred_check
      _
    $region31: #{tpu_custom_call.1} parent=1 // pred_check_branch
      %45 = sbr.rel (0) target = $region33
    $region32: #{tpu_custom_call.1} parent=1 // pred_region
      _
    $region33: #{tpu_custom_call.1} parent=1 // pred_fallthru
      _
    // Predicated region
    $region34: #{tpu_custom_call.1} parent=1 // pred_check
      _
    $region35: #{tpu_custom_call.1} parent=1 // pred_check_branch
      %47 = sbr.rel (0) target = $region37
    $region36: #{tpu_custom_call.1} parent=1 // pred_region
      _
    $region37: #{tpu_custom_call.1} parent=1 // pred_fallthru
      _
    // Predicated region
    $region38: #{tpu_custom_call.1} parent=1 // pred_check
      _
    $region39: #{tpu_custom_call.1} parent=1 // pred_check_branch
      %49 = sbr.rel (0) target = $region41
    $region40: #{tpu_custom_call.1} parent=1 // pred_region
      _
    $region41: #{tpu_custom_call.1} parent=1 // pred_fallthru
      _
    // Predicated region
    $region42: #{tpu_custom_call.1} parent=1 // pred_check
      _
    $region43: #{tpu_custom_call.1} parent=1 // pred_check_branch
      %51 = sbr.rel (0) target = $region45
    $region44: #{tpu_custom_call.1} parent=1 // pred_region
      _
    $region45: #{tpu_custom_call.1} parent=1 // pred_fallthru
      _
    // Predicated region
    $region46: #{tpu_custom_call.1} parent=1 // pred_check
      _
    $region47: #{tpu_custom_call.1} parent=1 // pred_check_branch
      %53 = sbr.rel (0) target = $region49
    $region48: #{tpu_custom_call.1} parent=1 // pred_region
      _
    $region49: #{tpu_custom_call.1} parent=1 // pred_fallthru
      _
    // Predicated region
    $region50: #{tpu_custom_call.1} parent=1 // pred_check
      _
    $region51: #{tpu_custom_call.1} parent=1 // pred_check_branch
      %55 = sbr.rel (0) target = $region53
    $region52: #{tpu_custom_call.1} parent=1 // pred_region
      _
    $region53: #{tpu_custom_call.1} parent=1 // pred_fallthru
      _
    // Predicated region
    $region54: #{tpu_custom_call.1} parent=1 // pred_check
      _
    $region55: #{tpu_custom_call.1} parent=1 // pred_check_branch
      %57 = sbr.rel (0) target = $region57
    $region56: #{tpu_custom_call.1} parent=1 // pred_region
      _
    $region57: #{tpu_custom_call.1} parent=1 // pred_fallthru
      _
    // Predicated region
    $region58: #{tpu_custom_call.1} parent=1 // pred_check
      _
    $region59: #{tpu_custom_call.1} parent=1 // pred_check_branch
      %59 = sbr.rel (0) target = $region61
    $region60: #{tpu_custom_call.1} parent=1 // pred_region
      _
    $region61: #{tpu_custom_call.1} parent=1 // pred_fallthru
      _
    // Predicated region
    $region62: #{tpu_custom_call.1} parent=1 // pred_check
      _
    $region63: #{tpu_custom_call.1} parent=1 // pred_check_branch
      %61 = sbr.rel (0) target = $region65
    $region64: #{tpu_custom_call.1} parent=1 // pred_region
      %62 = dma.done [#allocation3], 128
    $region65: #{tpu_custom_call.1} parent=1 // pred_fallthru
      _
    %v64 = vld [vmem:[#allocation2] sm:$0xff]
    %v65 = vpack.c.bf16 %v64, %v64
    %v66 = vld [vmem:[%s1] sm:$0xf]
    %v67 = vld [vmem:[%s1 + $0x4] sm:$0xf]
    %v68 = vld [vmem:[%s1 + $0x8] sm:$0xf]
    %v69 = vld [vmem:[%s1 + $0xc] sm:$0xf]
    %v70 = vld [vmem:[%s1 + $0x10] sm:$0xf]
    %v71 = vld [vmem:[%s1 + $0x14] sm:$0xf]
    %v72 = vld [vmem:[%s1 + $0x18] sm:$0xf]
    %v73 = vld [vmem:[%s1 + $0x1c] sm:$0xf]
    %v74 = vld [vmem:[%s2] sm:$0x1]
    %v76 = vlaneseq
    %v77 = vshrl.u32 %v76, 7
    %v78 = vsub.s32 0, %v77
    %v79 = vrot.slane %v74, %v78
    %v89 = vunpack.c.l.b16 %v66
    %v90 = vunpack.c.l.b16 %v67
    %v91 = vunpack.c.l.b16 %v68
    %v92 = vunpack.c.l.b16 %v69
    %v93 = vunpack.c.l.b16 %v70
    %v94 = vunpack.c.l.b16 %v71
    %v95 = vunpack.c.l.b16 %v72
    %v96 = vunpack.c.l.b16 %v73
    %v97 = vpack.c.b16 %v90, %v89
    %v98 = vpack.c.b16 %v92, %v91
    %v99 = vpack.c.b16 %v94, %v93
    %v100 = vpack.c.b16 %v96, %v95
    %vm105 = vcmask 523264
    %v107 = vsel %vm105, %v65, 0
    %109 = vmatprep.subr.bf16.mxu0 0
    %110 = vmatpush1.bf16.msra.mxu0 0
    %111 = vmatprep.subr.bf16.mxu0 0
    %112 = vmatpush1.bf16.msra.mxu0 0
    %113 = vmatprep.subr.bf16.mxu0 0
    %114 = vmatpush1.bf16.msra.mxu0 0
    %115 = vmatprep.subr.bf16.mxu0 0
    %116 = vmatpush1.bf16.msra.mxu0 0
    %117 = vmatprep.subr.bf16.mxu0 0
    %118 = vmatpush1.bf16.msra.mxu0 %v100
    %119 = vmatprep.subr.bf16.mxu0 0
    %120 = vmatpush1.bf16.msra.mxu0 %v99
    %121 = vmatprep.subr.bf16.mxu0 0
    %122 = vmatpush1.bf16.msra.mxu0 %v98
    %123 = vmatprep.subr.bf16.mxu0 0
    %124 = vmatpush1.bf16.msra.mxu0 %v97
    %125 = vmatprep.subr.bf16.mxu0 0
    %126 = vmatpush2.bf16.msra.mxu0 0
    %127 = vmatprep.subr.bf16.mxu0 0
    %128 = vmatpush2.bf16.msra.mxu0 0
    %129 = vmatprep.subr.bf16.mxu0 0
    %130 = vmatpush2.bf16.msra.mxu0 0
    %131 = vmatprep.subr.bf16.mxu0 0
    %132 = vmatpush2.bf16.msra.mxu0 0
    %133 = vmatprep.subr.bf16.mxu0 0
    %134 = vmatpush2.bf16.msra.mxu0 0
    %135 = vmatprep.subr.bf16.mxu0 0
    %136 = vmatpush2.bf16.msra.mxu0 0
    %137 = vmatprep.subr.bf16.mxu0 0
    %138 = vmatpush2.bf16.msra.mxu0 0
    %139 = vmatprep.subr.bf16.mxu0 0
    %140 = vmatpush2.bf16.msra.mxu0 0
    %141 = vmatprep.mubr.bf16.mxu0 0
    %142 = vmatmul.mubr.bf16.gmra.mxu0 %v107
    %v143 = vpop.f32.mrf.mxu0
    %v144 = vadd.f32 %v79, %v143
    %v145 = vpop.f32.mrf.mxu0
    %v146 = vpop.f32.mrf.mxu0
    %v147 = vpop.f32.mrf.mxu0
    %148 = vdwg.mxu0
    %v149 = vld [vmem:[%s3] sm:$0x1]
    %v150 = vld [vmem:[%s4] sm:$0x1]
    %vm151 = vcmask 261120
    %v152 = vsel %vm151, %v144, 0.0
    %153 = vadd.xlane.f32.xlu0 %v152
    %v154 = vpop.xlane.xlu0 %153
    %v155 = vmul.f32 %v144, %v144
    %v156 = vsel %vm151, %v155, 0.0
    %157 = vadd.xlane.f32.xlu0 %v156
    %v158 = vpop.xlane.xlu0 %157
    %v159 = vmul.f32 %v154, 0.03125
    %v160 = vmul.f32 %v158, 0.03125
    %v161 = vmul.f32 %v159, %v159
    %v162 = vsub.f32 %v160, %v161
    %v163 = vmax.f32 %v162, 0.0
    %v164 = vadd.f32 %v163, 1e-05
    %v165 = vrsqrt.pop %v164
    %v166 = vsub.f32 %v144, %v159
    %v167 = vmul.f32 %v166, %v165
    %v169 = vlaneseq
    %v170 = vshrl.u32 %v169, 7
    %v171 = vsub.s32 0, %v170
    %v172 = vrot.slane %v149, %v171
    %v174 = vmul.f32 %v167, %v172
    %v176 = vlaneseq
    %v177 = vshrl.u32 %v176, 7
    %v178 = vsub.s32 0, %v177
    %v179 = vrot.slane %v150, %v178
    %v181 = vadd.f32 %v174, %v179
    %v182 = vmul.f32 %v181, 0.5
    %v183 = vmul.f32 %v181, 0.044715
    %v184 = vmul.f32 %v183, %v181
    %v185 = vmul.f32 %v184, %v181
    %v186 = vadd.f32 %v181, %v185
    %v187 = vmul.f32 %v186, 0.7978846
    %v188 = vtanh.pop %v187
    %v189 = vadd.f32 %v188, 1.0
    %v190 = vmul.f32 %v182, %v189
    %v191 = vld [vmem:[%s7] sm:$0x1]
    %v192 = vld [vmem:[%s8] sm:$0x1]
    %v193 = vsel %vm151, %v190, 0.0
    %194 = vadd.xlane.f32.xlu0 %v193
    %v195 = vpop.xlane.xlu0 %194
    %v196 = vmul.f32 %v190, %v190
    %v197 = vsel %vm151, %v196, 0.0
    %198 = vadd.xlane.f32.xlu0 %v197
    %v199 = vpop.xlane.xlu0 %198
    %v200 = vmul.f32 %v195, 0.03125
    %v201 = vmul.f32 %v199, 0.03125
    %v202 = vmul.f32 %v200, %v200
    %v203 = vsub.f32 %v201, %v202
    %v204 = vmax.f32 %v203, 0.0
    %v205 = vadd.f32 %v204, 1e-05
    %v206 = vrsqrt.pop %v205
    %v207 = vsub.f32 %v190, %v200
    %v208 = vmul.f32 %v207, %v206
    %v210 = vlaneseq
    %v211 = vshrl.u32 %v210, 7
    %v212 = vsub.s32 0, %v211
    %v213 = vrot.slane %v191, %v212
    %v215 = vmul.f32 %v208, %v213
    %v217 = vlaneseq
    %v218 = vshrl.u32 %v217, 7
    %v219 = vsub.s32 0, %v218
    %v220 = vrot.slane %v192, %v219
    %v222 = vadd.f32 %v215, %v220
    %v223 = vpack.c.bf16 %v222, %v222
    %v224 = vld [vmem:[%s5] sm:$0xf]
    %v225 = vld [vmem:[%s5 + $0x4] sm:$0xf]
    %v226 = vld [vmem:[%s5 + $0x8] sm:$0xf]
    %v227 = vld [vmem:[%s5 + $0xc] sm:$0xf]
    %v228 = vld [vmem:[%s6] sm:$0x1]
    %v230 = vlaneseq
    %v231 = vshrl.u32 %v230, 7
    %v232 = vsub.s32 0, %v231
    %v233 = vrot.slane %v228, %v232
    %v239 = vunpack.c.l.b16 %v224
    %v240 = vunpack.c.l.b16 %v225
    %v241 = vunpack.c.l.b16 %v226
    %v242 = vunpack.c.l.b16 %v227
    %v243 = vpack.c.b16 %v240, %v239
    %v244 = vpack.c.b16 %v242, %v241
    %v248 = vsel %vm151, %v223, 0
    %250 = vmatprep.subr.bf16.mxu0 0
    %251 = vmatpush1.bf16.msra.mxu0 0
    %252 = vmatprep.subr.bf16.mxu0 0
    %253 = vmatpush1.bf16.msra.mxu0 0
    %254 = vmatprep.subr.bf16.mxu0 0
    %255 = vmatpush1.bf16.msra.mxu0 0
    %256 = vmatprep.subr.bf16.mxu0 0
    %257 = vmatpush1.bf16.msra.mxu0 0
    %258 = vmatprep.subr.bf16.mxu0 0
    %259 = vmatpush1.bf16.msra.mxu0 0
    %260 = vmatprep.subr.bf16.mxu0 0
    %261 = vmatpush1.bf16.msra.mxu0 0
    %262 = vmatprep.subr.bf16.mxu0 0
    %263 = vmatpush1.bf16.msra.mxu0 %v244
    %264 = vmatprep.subr.bf16.mxu0 0
    %265 = vmatpush1.bf16.msra.mxu0 %v243
    %266 = vmatprep.subr.bf16.mxu0 0
    %267 = vmatpush2.bf16.msra.mxu0 0
    %268 = vmatprep.subr.bf16.mxu0 0
    %269 = vmatpush2.bf16.msra.mxu0 0
    %270 = vmatprep.subr.bf16.mxu0 0
    %271 = vmatpush2.bf16.msra.mxu0 0
    %272 = vmatprep.subr.bf16.mxu0 0
    %273 = vmatpush2.bf16.msra.mxu0 0
    %274 = vmatprep.subr.bf16.mxu0 0
    %275 = vmatpush2.bf16.msra.mxu0 0
    %276 = vmatprep.subr.bf16.mxu0 0
    %277 = vmatpush2.bf16.msra.mxu0 0
    %278 = vmatprep.subr.bf16.mxu0 0
    %279 = vmatpush2.bf16.msra.mxu0 0
    %280 = vmatprep.subr.bf16.mxu0 0
    %281 = vmatpush2.bf16.msra.mxu0 0
    %282 = vmatprep.mubr.bf16.mxu0 0
    %283 = vmatmul.mubr.bf16.gmra.mxu0 %v248
    %v284 = vpop.f32.mrf.mxu0
    %v285 = vadd.f32 %v233, %v284
    %v286 = vpop.f32.mrf.mxu0
    %v287 = vpop.f32.mrf.mxu0
    %v288 = vpop.f32.mrf.mxu0
    %289 = vdwg.mxu0
    %v290 = vmul.f32 %v285, 0.5
    %v291 = vmul.f32 %v285, 0.044715
    %v292 = vmul.f32 %v291, %v285
    %v293 = vmul.f32 %v292, %v285
    %v294 = vadd.f32 %v285, %v293
    %v295 = vmul.f32 %v294, 0.7978846
    %v296 = vtanh.pop %v295
    %v297 = vadd.f32 %v296, 1.0
    %v298 = vmul.f32 %v290, %v297
    %v299 = vadd.f32 %v190, %v298
    %v300 = vld [vmem:[%s11] sm:$0x1]
    %v301 = vld [vmem:[%s12] sm:$0x1]
    %v302 = vsel %vm151, %v299, 0.0
    %303 = vadd.xlane.f32.xlu0 %v302
    %v304 = vpop.xlane.xlu0 %303
    %v305 = vmul.f32 %v299, %v299
    %v306 = vsel %vm151, %v305, 0.0
    %307 = vadd.xlane.f32.xlu0 %v306
    %v308 = vpop.xlane.xlu0 %307
    %v309 = vmul.f32 %v304, 0.03125
    %v310 = vmul.f32 %v308, 0.03125
    %v311 = vmul.f32 %v309, %v309
    %v312 = vsub.f32 %v310, %v311
    %v313 = vmax.f32 %v312, 0.0
    %v314 = vadd.f32 %v313, 1e-05
    %v315 = vrsqrt.pop %v314
    %v316 = vsub.f32 %v299, %v309
    %v317 = vmul.f32 %v316, %v315
    %v319 = vlaneseq
    %v320 = vshrl.u32 %v319, 7
    %v321 = vsub.s32 0, %v320
    %v322 = vrot.slane %v300, %v321
    %v324 = vmul.f32 %v317, %v322
    %v326 = vlaneseq
    %v327 = vshrl.u32 %v326, 7
    %v328 = vsub.s32 0, %v327
    %v329 = vrot.slane %v301, %v328
    %v331 = vadd.f32 %v324, %v329
    %v332 = vpack.c.bf16 %v331, %v331
    %v333 = vld [vmem:[%s9] sm:$0xf]
    %v334 = vld [vmem:[%s9 + $0x4] sm:$0xf]
    %v335 = vld [vmem:[%s9 + $0x8] sm:$0xf]
    %v336 = vld [vmem:[%s9 + $0xc] sm:$0xf]
    %v337 = vld [vmem:[%s10] sm:$0x1]
    %v339 = vlaneseq
    %v340 = vshrl.u32 %v339, 7
    %v341 = vsub.s32 0, %v340
    %v342 = vrot.slane %v337, %v341
    %v348 = vunpack.c.l.b16 %v333
    %v349 = vunpack.c.l.b16 %v334
    %v350 = vunpack.c.l.b16 %v335
    %v351 = vunpack.c.l.b16 %v336
    %v352 = vpack.c.b16 %v349, %v348
    %v353 = vpack.c.b16 %v351, %v350
    %v357 = vsel %vm151, %v332, 0
    %359 = vmatprep.subr.bf16.mxu0 0
    %360 = vmatpush1.bf16.msra.mxu0 0
    %361 = vmatprep.subr.bf16.mxu0 0
    %362 = vmatpush1.bf16.msra.mxu0 0
    %363 = vmatprep.subr.bf16.mxu0 0
    %364 = vmatpush1.bf16.msra.mxu0 0
    %365 = vmatprep.subr.bf16.mxu0 0
    %366 = vmatpush1.bf16.msra.mxu0 0
    %367 = vmatprep.subr.bf16.mxu0 0
    %368 = vmatpush1.bf16.msra.mxu0 0
    %369 = vmatprep.subr.bf16.mxu0 0
    %370 = vmatpush1.bf16.msra.mxu0 0
    %371 = vmatprep.subr.bf16.mxu0 0
    %372 = vmatpush1.bf16.msra.mxu0 %v353
    %373 = vmatprep.subr.bf16.mxu0 0
    %374 = vmatpush1.bf16.msra.mxu0 %v352
    %375 = vmatprep.subr.bf16.mxu0 0
    %376 = vmatpush2.bf16.msra.mxu0 0
    %377 = vmatprep.subr.bf16.mxu0 0
    %378 = vmatpush2.bf16.msra.mxu0 0
    %379 = vmatprep.subr.bf16.mxu0 0
    %380 = vmatpush2.bf16.msra.mxu0 0
    %381 = vmatprep.subr.bf16.mxu0 0
    %382 = vmatpush2.bf16.msra.mxu0 0
    %383 = vmatprep.subr.bf16.mxu0 0
    %384 = vmatpush2.bf16.msra.mxu0 0
    %385 = vmatprep.subr.bf16.mxu0 0
    %386 = vmatpush2.bf16.msra.mxu0 0
    %387 = vmatprep.subr.bf16.mxu0 0
    %388 = vmatpush2.bf16.msra.mxu0 0
    %389 = vmatprep.subr.bf16.mxu0 0
    %390 = vmatpush2.bf16.msra.mxu0 0
    %391 = vmatprep.mubr.bf16.mxu0 0
    %392 = vmatmul.mubr.bf16.gmra.mxu0 %v357
    %v393 = vpop.f32.mrf.mxu0
    %v394 = vadd.f32 %v342, %v393
    %v395 = vpop.f32.mrf.mxu0
    %v396 = vpop.f32.mrf.mxu0
    %v397 = vpop.f32.mrf.mxu0
    %398 = vdwg.mxu0
    %v399 = vmul.f32 %v394, 0.5
    %v400 = vmul.f32 %v394, 0.044715
    %v401 = vmul.f32 %v400, %v394
    %v402 = vmul.f32 %v401, %v394
    %v403 = vadd.f32 %v394, %v402
    %v404 = vmul.f32 %v403, 0.7978846
    %v405 = vtanh.pop %v404
    %v406 = vadd.f32 %v405, 1.0
    %v407 = vmul.f32 %v399, %v406
    %v408 = vadd.f32 %v299, %v407
    %v409 = vpack.c.bf16 %v408, %v408
    %v410 = vld [vmem:[%s13] sm:$0xf]
    %v411 = vld [vmem:[%s13 + $0x4] sm:$0xf]
    %v412 = vld [vmem:[%s13 + $0x8] sm:$0xf]
    %v413 = vld [vmem:[%s13 + $0xc] sm:$0xf]
    %v414 = vld [vmem:[%s14] sm:$0x1]
    %v416 = vlaneseq
    %v417 = vshrl.u32 %v416, 7
    %v418 = vsub.s32 0, %v417
    %v419 = vrot.slane %v414, %v418
    %v425 = vunpack.c.l.b16 %v410
    %v426 = vunpack.c.l.b16 %v411
    %v427 = vunpack.c.l.b16 %v412
    %v428 = vunpack.c.l.b16 %v413
    %v429 = vpack.c.b16 %v426, %v425
    %v430 = vpack.c.b16 %v428, %v427
    %v434 = vsel %vm151, %v409, 0
    %436 = vmatprep.subr.bf16.mxu0 0
    %437 = vmatpush1.bf16.msra.mxu0 0
    %438 = vmatprep.subr.bf16.mxu0 0
    %439 = vmatpush1.bf16.msra.mxu0 0
    %440 = vmatprep.subr.bf16.mxu0 0
    %441 = vmatpush1.bf16.msra.mxu0 0
    %442 = vmatprep.subr.bf16.mxu0 0
    %443 = vmatpush1.bf16.msra.mxu0 0
    %444 = vmatprep.subr.bf16.mxu0 0
    %445 = vmatpush1.bf16.msra.mxu0 0
    %446 = vmatprep.subr.bf16.mxu0 0
    %447 = vmatpush1.bf16.msra.mxu0 0
    %448 = vmatprep.subr.bf16.mxu0 0
    %449 = vmatpush1.bf16.msra.mxu0 %v430
    %450 = vmatprep.subr.bf16.mxu0 0
    %451 = vmatpush1.bf16.msra.mxu0 %v429
    %452 = vmatprep.subr.bf16.mxu0 0
    %453 = vmatpush2.bf16.msra.mxu0 0
    %454 = vmatprep.subr.bf16.mxu0 0
    %455 = vmatpush2.bf16.msra.mxu0 0
    %456 = vmatprep.subr.bf16.mxu0 0
    %457 = vmatpush2.bf16.msra.mxu0 0
    %458 = vmatprep.subr.bf16.mxu0 0
    %459 = vmatpush2.bf16.msra.mxu0 0
    %460 = vmatprep.subr.bf16.mxu0 0
    %461 = vmatpush2.bf16.msra.mxu0 0
    %462 = vmatprep.subr.bf16.mxu0 0
    %463 = vmatpush2.bf16.msra.mxu0 0
    %464 = vmatprep.subr.bf16.mxu0 0
    %465 = vmatpush2.bf16.msra.mxu0 0
    %466 = vmatprep.subr.bf16.mxu0 0
    %467 = vmatpush2.bf16.msra.mxu0 0
    %468 = vmatprep.mubr.bf16.mxu0 0
    %469 = vmatmul.mubr.bf16.gmra.mxu0 %v434
    %v470 = vpop.f32.mrf.mxu0
    %v471 = vadd.f32 %v419, %v470
    %v472 = vpop.f32.mrf.mxu0
    %v473 = vpop.f32.mrf.mxu0
    %v474 = vpop.f32.mrf.mxu0
    %475 = vdwg.mxu0
    %476 = vst [vmem:[#allocation5] sm:$0xff] %v471
    // Predicated region
    $region66: #{tpu_custom_call.1} parent=1 // pred_check
      _
    $region67: #{tpu_custom_call.1} parent=1 // pred_check_branch
      %478 = sbr.rel (0) target = $region69
    $region68: #{tpu_custom_call.1} parent=1 // pred_region
      %s480 = ssub.s32 128, 128
      %481 = vsyncadd [#allocation4], %s480
      %s483 = sshll.u32 [#allocation5], 4
      %s484 = int_to_ptr.vmem [resolvable:$true] %s483
      %486 = dma.vmem_to_hbm [thread:$0]  %s484, 128, %s15, [#allocation4]
    $region69: #{tpu_custom_call.1} parent=1 // pred_fallthru
      _
    // Predicated region
    $region70: #{tpu_custom_call.1} parent=1 // pred_check
      _
    $region71: #{tpu_custom_call.1} parent=1 // pred_check_branch
      %488 = sbr.rel (0) target = $region73
    $region72: #{tpu_custom_call.1} parent=1 // pred_region
      %489 = dma.done [#allocation4], 128
    $region73: #{tpu_custom_call.1} parent=1 // pred_fallthru
      _
    %490 = vsyncpa [#allocation3], 1
    %491 = vsyncpa [#allocation4], 1

// kernel: tpu_custom_call.1
$region0: #{tpu_custom_call.1}
  #allocation0 [shape = 'u32[]', space=smem, size = 0x4, offset = 0x4, fixed_abs, tag = 'smem constant byte address 0x4 - core index']
  #allocation1 [shape = 'u32[144,128]{1,0:T(1,128)}', space=vmem, size = 0x12000, scoped, tag = 'internal scratch']
  %s0 = inlined_call_operand.hbm [shape: f32[8,64], index: 0, kind: input, shape index: {}]
  %s1 = inlined_call_operand.vmem [shape: bf16[64,32], index: 1, kind: input, shape index: {}]
  %s2 = inlined_call_operand.vmem [shape: f32[1,32], index: 2, kind: input, shape index: {}]
  %s3 = inlined_call_operand.vmem [shape: f32[1,32], index: 3, kind: input, shape index: {}]
  %s4 = inlined_call_operand.vmem [shape: f32[1,32], index: 4, kind: input, shape index: {}]
  %s5 = inlined_call_operand.vmem [shape: bf16[32,32], index: 5, kind: input, shape index: {}]
  %s6 = inlined_call_operand.vmem [shape: f32[1,32], index: 6, kind: input, shape index: {}]
  %s7 = inlined_call_operand.vmem [shape: f32[1,32], index: 7, kind: input, shape index: {}]
  %s8 = inlined_call_operand.vmem [shape: f32[1,32], index: 8, kind: input, shape index: {}]
  %s9 = inlined_call_operand.vmem [shape: bf16[32,32], index: 9, kind: input, shape index: {}]
  %s10 = inlined_call_operand.vmem [shape: f32[1,32], index: 10, kind: input, shape index: {}]
  %s11 = inlined_call_operand.vmem [shape: f32[1,32], index: 11, kind: input, shape index: {}]
  %s12 = inlined_call_operand.vmem [shape: f32[1,32], index: 12, kind: input, shape index: {}]
  %s13 = inlined_call_operand.vmem [shape: bf16[32,128], index: 13, kind: input, shape index: {}]
  %s14 = inlined_call_operand.vmem [shape: f32[1,128], index: 14, kind: input, shape index: {}]
  %s15 = inlined_call_operand.hbm [shape: f32[8,128], index: 15, kind: output, shape index: {}]
  %s16 = sld [smem:[#allocation0]]
  $region74: #{tpu_custom_call.1} parent=0
    _
  %s18 = ssub.s32 1, %s16
  %s19 = scalar_select 0, %s18, %s16
  $region1: #{tpu_custom_call.1} parent=0
    #allocation2 [shape = 'u8[4096]{0}', space=vmem, size = 0x1000, scoped, tag = 'input window, operand 0, single buffered']
    #allocation3 [shape = 's32[1]{0}', space=sflag, size = 0x4, scoped, tag = 'scoped memory for tpu_custom_call.1']
    #allocation4 [shape = 's32[1]{0}', space=sflag, size = 0x4, scoped, tag = 'scoped memory for tpu_custom_call.1']
    #allocation5 [shape = 'u8[4096]{0}', space=vmem, size = 0x1000, scoped, tag = 'output window, operand 0, single buffered']
    %20 = vsyncpa [#allocation3], 0
    %21 = vsyncpa [#allocation4], 0
    // Predicated region
    $region2: #{tpu_custom_call.1} parent=1 // pred_check
      _
    $region3: #{tpu_custom_call.1} parent=1 // pred_check_branch
      %23 = sbr.rel (0) target = $region5
    $region4: #{tpu_custom_call.1} parent=1 // pred_region
      %s25 = ssub.s32 128, 128
      %26 = vsyncadd [#allocation3], %s25
      %s28 = sshll.u32 [#allocation2], 4
      %s29 = int_to_ptr.vmem [resolvable:$true] %s28
      %31 = dma.hbm_to_vmem [thread:$0]  %s0, 128, %s29, [#allocation3]
    $region5: #{tpu_custom_call.1} parent=1 // pred_fallthru
      _
    // Predicated region
    $region6: #{tpu_custom_call.1} parent=1 // pred_check
      _
    $region7: #{tpu_custom_call.1} parent=1 // pred_check_branch
      %33 = sbr.rel (0) target = $region9
    $region8: #{tpu_custom_call.1} parent=1 // pred_region
      _
    $region9: #{tpu_custom_call.1} parent=1 // pred_fallthru
      _
    // Predicated region
    $region10: #{tpu_custom_call.1} parent=1 // pred_check
      _
    $region11: #{tpu_custom_call.1} parent=1 // pred_check_branch
      %35 = sbr.rel (0) target = $region13
    $region12: #{tpu_custom_call.1} parent=1 // pred_region
      _
    $region13: #{tpu_custom_call.1} parent=1 // pred_fallthru
      _
    // Predicated region
    $region14: #{tpu_custom_call.1} parent=1 // pred_check
      _
    $region15: #{tpu_custom_call.1} parent=1 // pred_check_branch
      %37 = sbr.rel (0) target = $region17
    $region16: #{tpu_custom_call.1} parent=1 // pred_region
      _
    $region17: #{tpu_custom_call.1} parent=1 // pred_fallthru
      _
    // Predicated region
    $region18: #{tpu_custom_call.1} parent=1 // pred_check
      _
    $region19: #{tpu_custom_call.1} parent=1 // pred_check_branch
      %39 = sbr.rel (0) target = $region21
    $region20: #{tpu_custom_call.1} parent=1 // pred_region
      _
    $region21: #{tpu_custom_call.1} parent=1 // pred_fallthru
      _
    // Predicated region
    $region22: #{tpu_custom_call.1} parent=1 // pred_check
      _
    $region23: #{tpu_custom_call.1} parent=1 // pred_check_branch
      %41 = sbr.rel (0) target = $region25
    $region24: #{tpu_custom_call.1} parent=1 // pred_region
      _
    $region25: #{tpu_custom_call.1} parent=1 // pred_fallthru
      _
    // Predicated region
    $region26: #{tpu_custom_call.1} parent=1 // pred_check
      _
    $region27: #{tpu_custom_call.1} parent=1 // pred_check_branch
      %43 = sbr.rel (0) target = $region29
    $region28: #{tpu_custom_call.1} parent=1 // pred_region
      _
    $region29: #{tpu_custom_call.1} parent=1 // pred_fallthru
      _
    // Predicated region
    $region30: #{tpu_custom_call.1} parent=1 // pred_check
      _
    $region31: #{tpu_custom_call.1} parent=1 // pred_check_branch
      %45 = sbr.rel (0) target = $region33
    $region32: #{tpu_custom_call.1} parent=1 // pred_region
      _
    $region33: #{tpu_custom_call.1} parent=1 // pred_fallthru
      _
    // Predicated region
    $region34: #{tpu_custom_call.1} parent=1 // pred_check
      _
    $region35: #{tpu_custom_call.1} parent=1 // pred_check_branch
      %47 = sbr.rel (0) target = $region37
    $region36: #{tpu_custom_call.1} parent=1 // pred_region
      _
    $region37: #{tpu_custom_call.1} parent=1 // pred_fallthru
      _
    // Predicated region
    $region38: #{tpu_custom_call.1} parent=1 // pred_check
      _
    $region39: #{tpu_custom_call.1} parent=1 // pred_check_branch
      %49 = sbr.rel (0) target = $region41
    $region40: #{tpu_custom_call.1} parent=1 // pred_region
      _
    $region41: #{tpu_custom_call.1} parent=1 // pred_fallthru
      _
    // Predicated region
    $region42: #{tpu_custom_call.1} parent=1 // pred_check
      _
    $region43: #{tpu_custom_call.1} parent=1 // pred_check_branch
      %51 = sbr.rel (0) target = $region45
    $region44: #{tpu_custom_call.1} parent=1 // pred_region
      _
    $region45: #{tpu_custom_call.1} parent=1 // pred_fallthru
      _
    // Predicated region
    $region46: #{tpu_custom_call.1} parent=1 // pred_check
      _
    $region47: #{tpu_custom_call.1} parent=1 // pred_check_branch
      %53 = sbr.rel (0) target = $region49
    $region48: #{tpu_custom_call.1} parent=1 // pred_region
      _
    $region49: #{tpu_custom_call.1} parent=1 // pred_fallthru
      _
    // Predicated region
    $region50: #{tpu_custom_call.1} parent=1 // pred_check
      _
    $region51: #{tpu_custom_call.1} parent=1 // pred_check_branch
      %55 = sbr.rel (0) target = $region53
    $region52: #{tpu_custom_call.1} parent=1 // pred_region
      _
    $region53: #{tpu_custom_call.1} parent=1 // pred_fallthru
      _
    // Predicated region
    $region54: #{tpu_custom_call.1} parent=1 // pred_check
      _
    $region55: #{tpu_custom_call.1} parent=1 // pred_check_branch
      %57 = sbr.rel (0) target = $region57
    $region56: #{tpu_custom_call.1} parent=1 // pred_region
      _
    $region57: #{tpu_custom_call.1} parent=1 // pred_fallthru
      _
    // Predicated region
    $region58: #{tpu_custom_call.1} parent=1 // pred_check
      _
    $region59: #{tpu_custom_call.1} parent=1 // pred_check_branch
      %59 = sbr.rel (0) target = $region61
    $region60: #{tpu_custom_call.1} parent=1 // pred_region
      _
    $region61: #{tpu_custom_call.1} parent=1 // pred_fallthru
      _
    // Predicated region
    $region62: #{tpu_custom_call.1} parent=1 // pred_check
      _
    $region63: #{tpu_custom_call.1} parent=1 // pred_check_branch
      %61 = sbr.rel (0) target = $region65
    $region64: #{tpu_custom_call.1} parent=1 // pred_region
      %62 = dma.done [#allocation3], 128
    $region65: #{tpu_custom_call.1} parent=1 // pred_fallthru
      _
    %v64 = vld [vmem:[#allocation2] sm:$0xff]
    %v65 = vpack.c.bf16 %v64, %v64
    %v66 = vld [vmem:[%s1] sm:$0xf]
    %v67 = vld [vmem:[%s1 + $0x4] sm:$0xf]
    %v68 = vld [vmem:[%s1 + $0x8] sm:$0xf]
    %v69 = vld [vmem:[%s1 + $0xc] sm:$0xf]
    %v70 = vld [vmem:[%s1 + $0x10] sm:$0xf]
    %v71 = vld [vmem:[%s1 + $0x14] sm:$0xf]
    %v72 = vld [vmem:[%s1 + $0x18] sm:$0xf]
    %v73 = vld [vmem:[%s1 + $0x1c] sm:$0xf]
    %v74 = vld [vmem:[%s2] sm:$0x1]
    %v76 = vlaneseq
    %v77 = vshrl.u32 %v76, 7
    %v78 = vsub.s32 0, %v77
    %v79 = vrot.slane %v74, %v78
    %v89 = vunpack.c.l.b16 %v66
    %v90 = vunpack.c.l.b16 %v67
    %v91 = vunpack.c.l.b16 %v68
    %v92 = vunpack.c.l.b16 %v69
    %v93 = vunpack.c.l.b16 %v70
    %v94 = vunpack.c.l.b16 %v71
    %v95 = vunpack.c.l.b16 %v72
    %v96 = vunpack.c.l.b16 %v73
    %v97 = vpack.c.b16 %v90, %v89
    %v98 = vpack.c.b16 %v92, %v91
    %v99 = vpack.c.b16 %v94, %v93
    %v100 = vpack.c.b16 %v96, %v95
    %vm105 = vcmask 523264
    %v107 = vsel %vm105, %v65, 0
    %109 = vmatprep.subr.bf16.mxu0 0
    %110 = vmatpush1.bf16.msra.mxu0 0
    %111 = vmatprep.subr.bf16.mxu0 0
    %112 = vmatpush1.bf16.msra.mxu0 0
    %113 = vmatprep.subr.bf16.mxu0 0
    %114 = vmatpush1.bf16.msra.mxu0 0
    %115 = vmatprep.subr.bf16.mxu0 0
    %116 = vmatpush1.bf16.msra.mxu0 0
    %117 = vmatprep.subr.bf16.mxu0 0
    %118 = vmatpush1.bf16.msra.mxu0 %v100
    %119 = vmatprep.subr.bf16.mxu0 0
    %120 = vmatpush1.bf16.msra.mxu0 %v99
    %121 = vmatprep.subr.bf16.mxu0 0
    %122 = vmatpush1.bf16.msra.mxu0 %v98
    %123 = vmatprep.subr.bf16.mxu0 0
    %124 = vmatpush1.bf16.msra.mxu0 %v97
    %125 = vmatprep.subr.bf16.mxu0 0
    %126 = vmatpush2.bf16.msra.mxu0 0
    %127 = vmatprep.subr.bf16.mxu0 0
    %128 = vmatpush2.bf16.msra.mxu0 0
    %129 = vmatprep.subr.bf16.mxu0 0
    %130 = vmatpush2.bf16.msra.mxu0 0
    %131 = vmatprep.subr.bf16.mxu0 0
    %132 = vmatpush2.bf16.msra.mxu0 0
    %133 = vmatprep.subr.bf16.mxu0 0
    %134 = vmatpush2.bf16.msra.mxu0 0
    %135 = vmatprep.subr.bf16.mxu0 0
    %136 = vmatpush2.bf16.msra.mxu0 0
    %137 = vmatprep.subr.bf16.mxu0 0
    %138 = vmatpush2.bf16.msra.mxu0 0
    %139 = vmatprep.subr.bf16.mxu0 0
    %140 = vmatpush2.bf16.msra.mxu0 0
    %141 = vmatprep.mubr.bf16.mxu0 0
    %142 = vmatmul.mubr.bf16.gmra.mxu0 %v107
    %v143 = vpop.f32.mrf.mxu0
    %v144 = vadd.f32 %v79, %v143
    %v145 = vpop.f32.mrf.mxu0
    %v146 = vpop.f32.mrf.mxu0
    %v147 = vpop.f32.mrf.mxu0
    %148 = vdwg.mxu0
    %v149 = vld [vmem:[%s3] sm:$0x1]
    %v150 = vld [vmem:[%s4] sm:$0x1]
    %vm151 = vcmask 261120
    %v152 = vsel %vm151, %v144, 0.0
    %153 = vadd.xlane.f32.xlu0 %v152
    %v154 = vpop.xlane.xlu0 %153
    %v155 = vmul.f32 %v144, %v144
    %v156 = vsel %vm151, %v155, 0.0
    %157 = vadd.xlane.f32.xlu0 %v156
    %v158 = vpop.xlane.xlu0 %157
    %v159 = vmul.f32 %v154, 0.03125
    %v160 = vmul.f32 %v158, 0.03125
    %v161 = vmul.f32 %v159, %v159
    %v162 = vsub.f32 %v160, %v161
    %v163 = vmax.f32 %v162, 0.0
    %v164 = vadd.f32 %v163, 1e-05
    %v165 = vrsqrt.pop %v164
    %v166 = vsub.f32 %v144, %v159
    %v167 = vmul.f32 %v166, %v165
    %v169 = vlaneseq
    %v170 = vshrl.u32 %v169, 7
    %v171 = vsub.s32 0, %v170
    %v172 = vrot.slane %v149, %v171
    %v174 = vmul.f32 %v167, %v172
    %v176 = vlaneseq
    %v177 = vshrl.u32 %v176, 7
    %v178 = vsub.s32 0, %v177
    %v179 = vrot.slane %v150, %v178
    %v181 = vadd.f32 %v174, %v179
    %v182 = vmul.f32 %v181, 0.5
    %v183 = vmul.f32 %v181, 0.044715
    %v184 = vmul.f32 %v183, %v181
    %v185 = vmul.f32 %v184, %v181
    %v186 = vadd.f32 %v181, %v185
    %v187 = vmul.f32 %v186, 0.7978846
    %v188 = vtanh.pop %v187
    %v189 = vadd.f32 %v188, 1.0
    %v190 = vmul.f32 %v182, %v189
    %v191 = vld [vmem:[%s7] sm:$0x1]
    %v192 = vld [vmem:[%s8] sm:$0x1]
    %v193 = vsel %vm151, %v190, 0.0
    %194 = vadd.xlane.f32.xlu0 %v193
    %v195 = vpop.xlane.xlu0 %194
    %v196 = vmul.f32 %v190, %v190
    %v197 = vsel %vm151, %v196, 0.0
    %198 = vadd.xlane.f32.xlu0 %v197
    %v199 = vpop.xlane.xlu0 %198
    %v200 = vmul.f32 %v195, 0.03125
    %v201 = vmul.f32 %v199, 0.03125
    %v202 = vmul.f32 %v200, %v200
    %v203 = vsub.f32 %v201, %v202
    %v204 = vmax.f32 %v203, 0.0
    %v205 = vadd.f32 %v204, 1e-05
    %v206 = vrsqrt.pop %v205
    %v207 = vsub.f32 %v190, %v200
    %v208 = vmul.f32 %v207, %v206
    %v210 = vlaneseq
    %v211 = vshrl.u32 %v210, 7
    %v212 = vsub.s32 0, %v211
    %v213 = vrot.slane %v191, %v212
    %v215 = vmul.f32 %v208, %v213
    %v217 = vlaneseq
    %v218 = vshrl.u32 %v217, 7
    %v219 = vsub.s32 0, %v218
    %v220 = vrot.slane %v192, %v219
    %v222 = vadd.f32 %v215, %v220
    %v223 = vpack.c.bf16 %v222, %v222
    %v224 = vld [vmem:[%s5] sm:$0xf]
    %v225 = vld [vmem:[%s5 + $0x4] sm:$0xf]
    %v226 = vld [vmem:[%s5 + $0x8] sm:$0xf]
    %v227 = vld [vmem:[%s5 + $0xc] sm:$0xf]
    %v228 = vld [vmem:[%s6] sm:$0x1]
    %v230 = vlaneseq
    %v231 = vshrl.u32 %v230, 7
    %v232 = vsub.s32 0, %v231
    %v233 = vrot.slane %v228, %v232
    %v239 = vunpack.c.l.b16 %v224
    %v240 = vunpack.c.l.b16 %v225
    %v241 = vunpack.c.l.b16 %v226
    %v242 = vunpack.c.l.b16 %v227
    %v243 = vpack.c.b16 %v240, %v239
    %v244 = vpack.c.b16 %v242, %v241
    %v248 = vsel %vm151, %v223, 0
    %250 = vmatprep.subr.bf16.mxu0 0
    %251 = vmatpush1.bf16.msra.mxu0 0
    %252 = vmatprep.subr.bf16.mxu0 0
    %253 = vmatpush1.bf16.msra.mxu0 0
    %254 = vmatprep.subr.bf16.mxu0 0
    %255 = vmatpush1.bf16.msra.mxu0 0
    %256 = vmatprep.subr.bf16.mxu0 0
    %257 = vmatpush1.bf16.msra.mxu0 0
    %258 = vmatprep.subr.bf16.mxu0 0
    %259 = vmatpush1.bf16.msra.mxu0 0
    %260 = vmatprep.subr.bf16.mxu0 0
    %261 = vmatpush1.bf16.msra.mxu0 0
    %262 = vmatprep.subr.bf16.mxu0 0
    %263 = vmatpush1.bf16.msra.mxu0 %v244
    %264 = vmatprep.subr.bf16.mxu0 0
    %265 = vmatpush1.bf16.msra.mxu0 %v243
    %266 = vmatprep.subr.bf16.mxu0 0
    %267 = vmatpush2.bf16.msra.mxu0 0
    %268 = vmatprep.subr.bf16.mxu0 0
    %269 = vmatpush2.bf16.msra.mxu0 0
    %270 = vmatprep.subr.bf16.mxu0 0
    %271 = vmatpush2.bf16.msra.mxu0 0
    %272 = vmatprep.subr.bf16.mxu0 0
    %273 = vmatpush2.bf16.msra.mxu0 0
    %274 = vmatprep.subr.bf16.mxu0 0
    %275 = vmatpush2.bf16.msra.mxu0 0
    %276 = vmatprep.subr.bf16.mxu0 0
    %277 = vmatpush2.bf16.msra.mxu0 0
    %278 = vmatprep.subr.bf16.mxu0 0
    %279 = vmatpush2.bf16.msra.mxu0 0
    %280 = vmatprep.subr.bf16.mxu0 0
    %281 = vmatpush2.bf16.msra.mxu0 0
    %282 = vmatprep.mubr.bf16.mxu0 0
    %283 = vmatmul.mubr.bf16.gmra.mxu0 %v248
    %v284 = vpop.f32.mrf.mxu0
    %v285 = vadd.f32 %v233, %v284
    %v286 = vpop.f32.mrf.mxu0
    %v287 = vpop.f32.mrf.mxu0
    %v288 = vpop.f32.mrf.mxu0
    %289 = vdwg.mxu0
    %v290 = vmul.f32 %v285, 0.5
    %v291 = vmul.f32 %v285, 0.044715
    %v292 = vmul.f32 %v291, %v285
    %v293 = vmul.f32 %v292, %v285
    %v294 = vadd.f32 %v285, %v293
    %v295 = vmul.f32 %v294, 0.7978846
    %v296 = vtanh.pop %v295
    %v297 = vadd.f32 %v296, 1.0
    %v298 = vmul.f32 %v290, %v297
    %v299 = vadd.f32 %v190, %v298
    %v300 = vld [vmem:[%s11] sm:$0x1]
    %v301 = vld [vmem:[%s12] sm:$0x1]
    %v302 = vsel %vm151, %v299, 0.0
    %303 = vadd.xlane.f32.xlu0 %v302
    %v304 = vpop.xlane.xlu0 %303
    %v305 = vmul.f32 %v299, %v299
    %v306 = vsel %vm151, %v305, 0.0
    %307 = vadd.xlane.f32.xlu0 %v306
    %v308 = vpop.xlane.xlu0 %307
    %v309 = vmul.f32 %v304, 0.03125
    %v310 = vmul.f32 %v308, 0.03125
    %v311 = vmul.f32 %v309, %v309
    %v312 = vsub.f32 %v310, %v311
    %v313 = vmax.f32 %v312, 0.0
    %v314 = vadd.f32 %v313, 1e-05
    %v315 = vrsqrt.pop %v314
    %v316 = vsub.f32 %v299, %v309
    %v317 = vmul.f32 %v316, %v315
    %v319 = vlaneseq
    %v320 = vshrl.u32 %v319, 7
    %v321 = vsub.s32 0, %v320
    %v322 = vrot.slane %v300, %v321
    %v324 = vmul.f32 %v317, %v322
    %v326 = vlaneseq
    %v327 = vshrl.u32 %v326, 7
    %v328 = vsub.s32 0, %v327
    %v329 = vrot.slane %v301, %v328
    %v331 = vadd.f32 %v324, %v329
    %v332 = vpack.c.bf16 %v331, %v331
    %v333 = vld [vmem:[%s9] sm:$0xf]
    %v334 = vld [vmem:[%s9 + $0x4] sm:$0xf]
    %v335 = vld [vmem:[%s9 + $0x8] sm:$0xf]
    %v336 = vld [vmem:[%s9 + $0xc] sm:$0xf]
    %v337 = vld [vmem:[%s10] sm:$0x1]
    %v339 = vlaneseq
    %v340 = vshrl.u32 %v339, 7
    %v341 = vsub.s32 0, %v340
    %v342 = vrot.slane %v337, %v341
    %v348 = vunpack.c.l.b16 %v333
    %v349 = vunpack.c.l.b16 %v334
    %v350 = vunpack.c.l.b16 %v335
    %v351 = vunpack.c.l.b16 %v336
    %v352 = vpack.c.b16 %v349, %v348
    %v353 = vpack.c.b16 %v351, %v350
    %v357 = vsel %vm151, %v332, 0
    %359 = vmatprep.subr.bf16.mxu0 0
    %360 = vmatpush1.bf16.msra.mxu0 0
    %361 = vmatprep.subr.bf16.mxu0 0
    %362 = vmatpush1.bf16.msra.mxu0 0
    %363 = vmatprep.subr.bf16.mxu0 0
    %364 = vmatpush1.bf16.msra.mxu0 0
    %365 = vmatprep.subr.bf16.mxu0 0
    %366 = vmatpush1.bf16.msra.mxu0 0
    %367 = vmatprep.subr.bf16.mxu0 0
    %368 = vmatpush1.bf16.msra.mxu0 0
    %369 = vmatprep.subr.bf16.mxu0 0
    %370 = vmatpush1.bf16.msra.mxu0 0
    %371 = vmatprep.subr.bf16.mxu0 0
    %372 = vmatpush1.bf16.msra.mxu0 %v353
    %373 = vmatprep.subr.bf16.mxu0 0
    %374 = vmatpush1.bf16.msra.mxu0 %v352
    %375 = vmatprep.subr.bf16.mxu0 0
    %376 = vmatpush2.bf16.msra.mxu0 0
    %377 = vmatprep.subr.bf16.mxu0 0
    %378 = vmatpush2.bf16.msra.mxu0 0
    %379 = vmatprep.subr.bf16.mxu0 0
    %380 = vmatpush2.bf16.msra.mxu0 0
    %381 = vmatprep.subr.bf16.mxu0 0
    %382 = vmatpush2.bf16.msra.mxu0 0
    %383 = vmatprep.subr.bf16.mxu0 0
    %384 = vmatpush2.bf16.msra.mxu0 0
    %385 = vmatprep.subr.bf16.mxu0 0
    %386 = vmatpush2.bf16.msra.mxu0 0
    %387 = vmatprep.subr.bf16.mxu0 0
    %388 = vmatpush2.bf16.msra.mxu0 0
    %389 = vmatprep.subr.bf16.mxu0 0
    %390 = vmatpush2.bf16.msra.mxu0 0
    %391 = vmatprep.mubr.bf16.mxu0 0
    %392 = vmatmul.mubr.bf16.gmra.mxu0 %v357
    %v393 = vpop.f32.mrf.mxu0
    %v394 = vadd.f32 %v342, %v393
    %v395 = vpop.f32.mrf.mxu0
    %v396 = vpop.f32.mrf.mxu0
    %v397 = vpop.f32.mrf.mxu0
    %398 = vdwg.mxu0
    %v399 = vmul.f32 %v394, 0.5
    %v400 = vmul.f32 %v394, 0.044715
    %v401 = vmul.f32 %v400, %v394
    %v402 = vmul.f32 %v401, %v394
    %v403 = vadd.f32 %v394, %v402
    %v404 = vmul.f32 %v403, 0.7978846
    %v405 = vtanh.pop %v404
    %v406 = vadd.f32 %v405, 1.0
    %v407 = vmul.f32 %v399, %v406
    %v408 = vadd.f32 %v299, %v407
    %v409 = vpack.c.bf16 %v408, %v408
    %v410 = vld [vmem:[%s13] sm:$0xf]
    %v411 = vld [vmem:[%s13 + $0x4] sm:$0xf]
    %v412 = vld [vmem:[%s13 + $0x8] sm:$0xf]
    %v413 = vld [vmem:[%s13 + $0xc] sm:$0xf]
    %v414 = vld [vmem:[%s14] sm:$0x1]
    %v416 = vlaneseq
    %v417 = vshrl.u32 %v416, 7
    %v418 = vsub.s32 0, %v417
    %v419 = vrot.slane %v414, %v418
    %v425 = vunpack.c.l.b16 %v410
    %v426 = vunpack.c.l.b16 %v411
    %v427 = vunpack.c.l.b16 %v412
    %v428 = vunpack.c.l.b16 %v413
    %v429 = vpack.c.b16 %v426, %v425
    %v430 = vpack.c.b16 %v428, %v427
    %v434 = vsel %vm151, %v409, 0
    %436 = vmatprep.subr.bf16.mxu0 0
    %437 = vmatpush1.bf16.msra.mxu0 0
    %438 = vmatprep.subr.bf16.mxu0 0
    %439 = vmatpush1.bf16.msra.mxu0 0
    %440 = vmatprep.subr.bf16.mxu0 0
    %441 = vmatpush1.bf16.msra.mxu0 0
    %442 = vmatprep.subr.bf16.mxu0 0
    %443 = vmatpush1.bf16.msra.mxu0 0
    %444 = vmatprep.subr.bf16.mxu0 0
    %445 = vmatpush1.bf16.msra.mxu0 0
    %446 = vmatprep.subr.bf16.mxu0 0
    %447 = vmatpush1.bf16.msra.mxu0 0
    %448 = vmatprep.subr.bf16.mxu0 0
    %449 = vmatpush1.bf16.msra.mxu0 %v430
    %450 = vmatprep.subr.bf16.mxu0 0
    %451 = vmatpush1.bf16.msra.mxu0 %v429
    %452 = vmatprep.subr.bf16.mxu0 0
    %453 = vmatpush2.bf16.msra.mxu0 0
    %454 = vmatprep.subr.bf16.mxu0 0
    %455 = vmatpush2.bf16.msra.mxu0 0
    %456 = vmatprep.subr.bf16.mxu0 0
    %457 = vmatpush2.bf16.msra.mxu0 0
    %458 = vmatprep.subr.bf16.mxu0 0
    %459 = vmatpush2.bf16.msra.mxu0 0
    %460 = vmatprep.subr.bf16.mxu0 0
    %461 = vmatpush2.bf16.msra.mxu0 0
    %462 = vmatprep.subr.bf16.mxu0 0
    %463 = vmatpush2.bf16.msra.mxu0 0
    %464 = vmatprep.subr.bf16.mxu0 0
    %465 = vmatpush2.bf16.msra.mxu0 0
    %466 = vmatprep.subr.bf16.mxu0 0
    %467 = vmatpush2.bf16.msra.mxu0 0
    %468 = vmatprep.mubr.bf16.mxu0 0
    %469 = vmatmul.mubr.bf16.gmra.mxu0 %v434
    %v470 = vpop.f32.mrf.mxu0
    %v471 = vadd.f32 %v419, %v470
    %v472 = vpop.f32.mrf.mxu0
    %v473 = vpop.f32.mrf.mxu0
    %v474 = vpop.f32.mrf.mxu0
    %475 = vdwg.mxu0
    %476 = vst [vmem:[#allocation5] sm:$0xff] %v471
    // Predicated region
    $region66: #{tpu_custom_call.1} parent=1 // pred_check
      _
    $region67: #{tpu_custom_call.1} parent=1 // pred_check_branch
      %478 = sbr.rel (0) target = $region69
    $region68: #{tpu_custom_call.1} parent=1 // pred_region
      %s480 = ssub.s32 128, 128
      %481 = vsyncadd [#allocation4], %s480
      %s483 = sshll.u32 [#allocation5], 4
      %s484 = int_to_ptr.vmem [resolvable:$true] %s483
      %486 = dma.vmem_to_hbm [thread:$0]  %s484, 128, %s15, [#allocation4]
    $region69: #{tpu_custom_call.1} parent=1 // pred_fallthru
      _
    // Predicated region
    $region70: #{tpu_custom_call.1} parent=1 // pred_check
      _
    $region71: #{tpu_custom_call.1} parent=1 // pred_check_branch
      %488 = sbr.rel (0) target = $region73
    $region72: #{tpu_custom_call.1} parent=1 // pred_region
      %489 = dma.done [#allocation4], 128
    $region73: #{tpu_custom_call.1} parent=1 // pred_fallthru
      _
    %490 = vsyncpa [#allocation3], 1
    %491 = vsyncpa [#allocation4], 1

</llo_original>
